<compile_context>
chip_gen: v5e
topology: v5e:2x2
jax: 0.10.0
libtpu: 0.0.40
codegen_flags: <defaults>
</compile_context>

<pallas_src>
import functools
import math

import jax
import jax.numpy as jnp
from jax import lax
from jax.experimental import pallas as pl
from jax.experimental.pallas import tpu as pltpu


def _round_up(v, m):
    return (v + m - 1) // m * m


def _vmem_capacity_bytes():
    # Generation-aware VMEM budget (v7x: 64 MiB/TC, v5e/v6e: 128 MiB).
    try:
        return int(pltpu.get_tpu_info().vmem_capacity_bytes)
    except Exception:
        return 128 << 20


def _pick_tq(tq, n_pad, vmem_cap):
    tq = max(8, min(int(tq), 128))
    if tq & (tq - 1):                       # power of two -> always divides n_pad (128k)
        tq = 1 << (tq.bit_length() - 1)
    small_vmem = vmem_cap <= (64 << 20)     # v7x-class TensorCore
    if small_vmem:
        tq = min(tq, 64)                    # shrink per-step working set for 64 MiB VMEM
    min_steps = 4 if small_vmem else 2      # feed both v7x TCs / keep the pipeline busy
    while n_pad // tq < min_steps and tq > 8:
        tq //= 2
    return tq


# -------------------------------------------------------------------------------------
# Kernel 1: fused projection, emitting final consumer shapes/dtypes directly.
#   q = x @ Wq^T, k = x @ Wk^T, v = x @ Wv^T   (compute_dtype)
#   sigma = x @ Ws^T                            (f32)
# -------------------------------------------------------------------------------------
def _proj_kernel(x_ref, wq_ref, wk_ref, wv_ref, ws_ref, q_ref, k_ref, v_ref, sig_ref):
    x = x_ref[0]                                              # (tr, D)
    q_ref[0] = jnp.dot(x, wq_ref[...], preferred_element_type=jnp.float32).astype(q_ref.dtype)
    k_ref[0] = jnp.dot(x, wk_ref[...], preferred_element_type=jnp.float32).astype(k_ref.dtype)
    v_ref[0] = jnp.dot(x, wv_ref[...], preferred_element_type=jnp.float32).astype(v_ref.dtype)
    sig_ref[0] = jnp.dot(x, ws_ref[...], preferred_element_type=jnp.float32)


# -------------------------------------------------------------------------------------
# Kernel 2: prior association P, series association S (softmax over the BATCH axis,
# faithful to the reference module), reconstruction Z = S @ V.   One query tile per step,
# full batch and full (VMEM-resident) K/V per step.
# -------------------------------------------------------------------------------------
def _attn_kernel(q_ref, sig_ref, k_ref, v_ref, z_ref, p_ref, *, n_real, sm_scale, approx):
    B, TQ, D = q_ref.shape
    n_pad = k_ref.shape[1]

    q = q_ref[...]                      # (B, TQ, D)      compute dtype
    k = k_ref[...]                      # (B, n_pad, D)   compute dtype (resident)
    v = v_ref[...]                      # (B, n_pad, D)
    sigma = sig_ref[...]                # (B, TQ, 1)      f32

    # ---- prior association: row-normalized Gaussian kernel over |i - j| ---------------
    q0 = (pl.program_id(0) * TQ).astype(jnp.float32)
    row = lax.broadcasted_iota(jnp.float32, (TQ, n_pad), 0) + q0
    col = lax.broadcasted_iota(jnp.float32, (TQ, n_pad), 1)
    diff = row - col
    dist2 = diff * diff                                        # (TQ, n_pad), B-independent
    if n_real < n_pad:
        # Padded key columns: bake the mask into dist2 so exp() -> 0 exactly (no extra
        # (B,TQ,n_pad) select afterwards).
        dist2 = jnp.where(col < n_real, dist2, jnp.float32(1e30))
        # Padded query rows have sigma == 0: give them a benign width so their P row stays
        # finite (those rows are don't-care and are sliced/masked away outside).
        qrow = lax.broadcasted_iota(jnp.float32, (TQ, 1), 0) + q0
        sigma = jnp.where(qrow[None, :, :] < n_real, sigma, jnp.float32(n_pad))
    dist2 = dist2[None, :, :]                                  # (1, TQ, n_pad)

    # The 1/(sqrt(2*pi)*sigma) prefactor is constant along the key axis and cancels
    # exactly in gaussian / div, so it is dropped.
    # TODO(synk): real rows with sigma ~ 0 are numerically fragile in the PyTorch module
    # too (no positivity transform); reproduced as-is.
    inv_sigma = pl.reciprocal(sigma, approx=approx)            # (B, TQ, 1)
    a = -0.5 * inv_sigma * inv_sigma                           # (B, TQ, 1) per-row scalar
    gaussian = jnp.exp(a * dist2)                              # one big mul + one exp
    div = jnp.sum(gaussian, axis=-1, keepdims=True)            # (B, TQ, 1)
    p_ref[...] = gaussian * pl.reciprocal(div, approx=approx)  # lane-dense (B,TQ,n_pad) store

    # ---- series association: softmax(Q K^T / sqrt(dim)) over the BATCH axis (dim=0) ----
    scores = jnp.einsum('bnd,bmd->bnm', q, k,
                        preferred_element_type=jnp.float32) * sm_scale
    m = jnp.max(scores, axis=0, keepdims=True)
    e = jnp.exp(scores - m)
    s = e * pl.reciprocal(jnp.sum(e, axis=0, keepdims=True), approx=approx)

    # ---- reconstruction Z = S @ V (padded keys contribute exactly 0: their V rows are 0)
    z_ref[...] = jnp.einsum('bnm,bmd->bnd', s.astype(v.dtype), v,
                            preferred_element_type=jnp.float32)


# -------------------------------------------------------------------------------------
# Forward (both pallas_calls), parameterized on single-buffering of resident blocks.
# -------------------------------------------------------------------------------------
def _forward(xp, wq_t, wk_t, wv_t, ws_t, *, B, N, n_pad, D, tq, tr, compute_dtype,
             approx, vmem_cap, single_buffer):
    c_item = jnp.dtype(compute_dtype).itemsize
    resident_kw = (dict(pipeline_mode=pl.Buffered(buffer_count=1))
                   if single_buffer else {})

    # ---- kernel 1: projection, 4 outputs already in their final shapes/dtypes ----------
    q, k, v, sigma = pl.pallas_call(
        _proj_kernel,
        out_shape=(jax.ShapeDtypeStruct((B, n_pad, D), compute_dtype),
                   jax.ShapeDtypeStruct((B, n_pad, D), compute_dtype),
                   jax.ShapeDtypeStruct((B, n_pad, D), compute_dtype),
                   jax.ShapeDtypeStruct((B, n_pad, 1), jnp.float32)),
        grid=(B, n_pad // tr),
        in_specs=[pl.BlockSpec((1, tr, D), lambda b, i: (b, i, 0)),
                  pl.BlockSpec((D, D), lambda b, i: (0, 0), **resident_kw),
                  pl.BlockSpec((D, D), lambda b, i: (0, 0), **resident_kw),
                  pl.BlockSpec((D, D), lambda b, i: (0, 0), **resident_kw),
                  pl.BlockSpec((D, 1), lambda b, i: (0, 0), **resident_kw)],
        out_specs=(pl.BlockSpec((1, tr, D), lambda b, i: (b, i, 0)),
                   pl.BlockSpec((1, tr, D), lambda b, i: (b, i, 0)),
                   pl.BlockSpec((1, tr, D), lambda b, i: (b, i, 0)),
                   pl.BlockSpec((1, tr, 1), lambda b, i: (b, i, 0))),
        compiler_params=pltpu.CompilerParams(
            dimension_semantics=("parallel", "parallel")),
        cost_estimate=pl.CostEstimate(
            flops=2 * B * n_pad * D * (3 * D + 1), transcendentals=0,
            bytes_accessed=(B * n_pad * D + 3 * D * D + D) * c_item
                           + 3 * B * n_pad * D * c_item + B * n_pad * 4),
    )(xp, wq_t, wk_t, wv_t, ws_t)

    # ---- kernel 2: attention over query tiles; B stays whole (softmax over batch axis) --
    kv_buffers = 1 if single_buffer else 2
    resident = kv_buffers * 2 * B * n_pad * D * c_item                   # K + V
    per_step = 2 * (B * tq * D * c_item + B * tq * 4                     # q + sigma tiles
                    + B * tq * D * 4 + B * tq * n_pad * 4)               # z + p tiles
    temps = 4 * B * tq * n_pad * 4 + tq * n_pad * 4                      # scores/exp/gauss
    vmem_bytes = int(min(int(0.85 * vmem_cap),                           # ~15% headroom
                         max(32 << 20, int(1.25 * (resident + per_step + temps)))))

    kernel = functools.partial(_attn_kernel, n_real=N,
                               sm_scale=1.0 / math.sqrt(D), approx=approx)

    z_pad, p_pad = pl.pallas_call(
        kernel,
        out_shape=(jax.ShapeDtypeStruct((B, n_pad, D), jnp.float32),
                   jax.ShapeDtypeStruct((B, n_pad, n_pad), jnp.float32)),
        grid=(n_pad // tq,),
        in_specs=[pl.BlockSpec((B, tq, D), lambda i: (0, i, 0)),          # Q tile
                  pl.BlockSpec((B, tq, 1), lambda i: (0, i, 0)),          # sigma tile
                  pl.BlockSpec((B, n_pad, D), lambda i: (0, 0, 0), **resident_kw),  # K
                  pl.BlockSpec((B, n_pad, D), lambda i: (0, 0, 0), **resident_kw)], # V
        out_specs=(pl.BlockSpec((B, tq, D), lambda i: (0, i, 0)),         # Z tile
                   pl.BlockSpec((B, tq, n_pad), lambda i: (0, i, 0))),    # P tile, lane-dense
        compiler_params=pltpu.CompilerParams(
            dimension_semantics=("parallel",),                            # megacore on v7x
            vmem_limit_bytes=vmem_bytes),
        cost_estimate=pl.CostEstimate(
            flops=4 * B * n_pad * n_pad * D,
            transcendentals=2 * B * n_pad * n_pad,
            bytes_accessed=3 * B * n_pad * D * c_item + B * n_pad * 4
                           + B * n_pad * D * 4 + B * n_pad * n_pad * 4),
    )(q, sigma, k, v)

    return z_pad, p_pad


# -------------------------------------------------------------------------------------
# Wrapper
# -------------------------------------------------------------------------------------
def single_anomaly_attention(x, wq, wk, wv, ws, *, tq=128,
                             compute_dtype=jnp.bfloat16, approx_reciprocal=None,
                             trim=True):
    """Forward of SingleAnomalyAttention.

    x: (B, N, D) f32; wq/wk/wv: (D, D) in PyTorch Linear layout (out, in); ws: (1, D).
    Returns (Z, P).  With trim=True: Z (B, N, D), P (B, N, N) f32.  With trim=False the
    padded (B, n_pad, ...) arrays are returned (padded key columns of P are exactly 0,
    padded query rows are don't-care) -- this avoids an extra O(B*N^2) HBM pass in XLA.
    """
    B, N, D = x.shape
    if approx_reciprocal is None:
        approx_reciprocal = jnp.dtype(compute_dtype) != jnp.dtype(jnp.float32)

    # Pad the sequence axis to a lane-dense multiple of 128 (zero rows -> zero K/V rows,
    # which keeps padded keys exact no-ops in Z; do NOT add a bias to the projections).
    n_pad = _round_up(N, 128)
    if n_pad != N:
        x = jnp.pad(x, ((0, 0), (0, n_pad - N), (0, 0)))

    xp = x.astype(compute_dtype)
    wq_t = wq.T.astype(compute_dtype)
    wk_t = wk.T.astype(compute_dtype)
    wv_t = wv.T.astype(compute_dtype)
    ws_t = ws.T.astype(compute_dtype)

    vmem_cap = _vmem_capacity_bytes()
    tr = next(t for t in (2048, 1024, 512, 256, 128) if n_pad % t == 0)   # big proj tile
    tq_eff = _pick_tq(tq, n_pad, vmem_cap)

    kwargs = dict(B=B, N=N, n_pad=n_pad, D=D, tq=tq_eff, tr=tr,
                  compute_dtype=compute_dtype, approx=bool(approx_reciprocal),
                  vmem_cap=vmem_cap)
    try:
        z_pad, p_pad = _forward(xp, wq_t, wk_t, wv_t, ws_t, single_buffer=True, **kwargs)
    except Exception:
        # pl.Buffered(buffer_count=1) (single-buffered resident blocks) not supported by
        # the installed jax/Mosaic -> fall back to default double buffering.
        z_pad, p_pad = _forward(xp, wq_t, wk_t, wv_t, ws_t, single_buffer=False, **kwargs)

    if trim and n_pad != N:
        # NOTE: this slice re-reads/writes the whole padded P in XLA; perf-sensitive
        # callers should pass trim=False and mask/slice lazily downstream.
        return z_pad[:, :N, :], p_pad[:, :N, :N]
    return z_pad, p_pad


# -------------------------------------------------------------------------------------
# Pure-JAX reproduction of the PyTorch forward (correctness reference)
# -------------------------------------------------------------------------------------
def _reference(x, wq, wk, wv, ws):
    B, N, D = x.shape
    q = x @ wq.T
    k = x @ wk.T
    v = x @ wv.T
    sigma = x @ ws.T                                                 # (B, N, 1)
    idx = jnp.arange(N, dtype=jnp.float32)
    dist = jnp.abs(idx[:, None] - idx[None, :])[None, :, :]
    g = (1.0 / (math.sqrt(2.0 * math.pi) * sigma)) * jnp.exp(-0.5 * jnp.square(dist / sigma))
    p = g / jnp.sum(g, axis=-1, keepdims=True)
    scores = jnp.einsum('bnd,bmd->bnm', q, k) / math.sqrt(D)
    s = jax.nn.softmax(scores, axis=0)                               # softmax over batch axis
    z = jnp.einsum('bnm,bmd->bnd', s, v)
    return z, p


if __name__ == "__main__":
    # Small shapes; N deliberately NOT a multiple of 128 so the padded, multi-tile path
    # is exercised (n_pad = 256 -> at least two query tiles).
    B, N, D = 2, 200, 32
    key = jax.random.PRNGKey(0)
    kx, kq, kk, kv, ks = jax.random.split(key, 5)
    bound = 1.0 / math.sqrt(D)                                       # PyTorch Linear init bound
    x = jax.random.normal(kx, (B, N, D), dtype=jnp.float32)
    wq = jax.random.uniform(kq, (D, D), jnp.float32, -bound, bound)
    wk = jax.random.uniform(kk, (D, D), jnp.float32, -bound, bound)
    wv = jax.random.uniform(kv, (D, D), jnp.float32, -bound, bound)
    ws = jax.random.uniform(ks, (1, D), jnp.float32, -bound, bound)

    z_ref, p_ref = _reference(x, wq, wk, wv, ws)

    # Fast path (recommended on v6e/v7x): bf16 MXU inputs + approx reciprocals.
    z_bf, p_bf = single_anomaly_attention(x, wq, wk, wv, ws, compute_dtype=jnp.bfloat16)
    jax.block_until_ready(z_bf)
    assert jnp.allclose(z_bf, z_ref, atol=1e-1, rtol=5e-2), "Z mismatch (bf16 path)"
    assert jnp.allclose(p_bf, p_ref, atol=5e-2, rtol=5e-2), "P mismatch (bf16 path)"

    # Precise path: f32 matmuls + exact reciprocals.
    z32, p32 = single_anomaly_attention(x, wq, wk, wv, ws, compute_dtype=jnp.float32)
    jax.block_until_ready(z32)
    assert jnp.allclose(z32, z_ref, atol=2e-3, rtol=2e-3), "Z mismatch (f32 path)"
    assert jnp.allclose(p32, p_ref, atol=2e-3, rtol=2e-3), "P mismatch (f32 path)"

    # Padded (untrimmed) fast path: no extra XLA post-slice; compare valid region only.
    z_pad, p_pad = single_anomaly_attention(x, wq, wk, wv, ws,
                                            compute_dtype=jnp.bfloat16, trim=False)
    jax.block_until_ready(z_pad)
    assert jnp.allclose(z_pad[:, :N, :], z_ref, atol=1e-1, rtol=5e-2), "Z mismatch (padded)"
    assert jnp.allclose(p_pad[:, :N, :N], p_ref, atol=5e-2, rtol=5e-2), "P mismatch (padded)"

    print("KERNEL_OK")
</pallas_src>

<mosaic_0001>
module attributes {stable_mosaic.version = 11 : i64} {
  func.func @_proj_kernel(%arg0: i32, %arg1: i32, %arg2: memref<1x256x32xbf16, #tpu.memory_space<vmem>>, %arg3: memref<32x32xbf16, #tpu.memory_space<vmem>>, %arg4: memref<32x32xbf16, #tpu.memory_space<vmem>>, %arg5: memref<32x32xbf16, #tpu.memory_space<vmem>>, %arg6: memref<32x1xbf16, #tpu.memory_space<vmem>>, %arg7: memref<1x256x32xbf16, #tpu.memory_space<vmem>>, %arg8: memref<1x256x32xbf16, #tpu.memory_space<vmem>>, %arg9: memref<1x256x32xbf16, #tpu.memory_space<vmem>>, %arg10: memref<1x256x1xf32, #tpu.memory_space<vmem>>) attributes {dimension_semantics = [#tpu.dimension_semantics<parallel>, #tpu.dimension_semantics<parallel>], iteration_bounds = array<i64: 2, 1>, scalar_prefetch = 0 : i64, scratch_operands = 0 : i64, tpu.core_type = #tpu.core_type<tc>, window_params = [{transform_indices = @transform_0, window_bounds = array<i64: 1, 256, 32>}, {pipeline_mode = #tpu.pipeline_mode<synchronous>, transform_indices = @transform_1, window_bounds = array<i64: 32, 32>}, {pipeline_mode = #tpu.pipeline_mode<synchronous>, transform_indices = @transform_2, window_bounds = array<i64: 32, 32>}, {pipeline_mode = #tpu.pipeline_mode<synchronous>, transform_indices = @transform_3, window_bounds = array<i64: 32, 32>}, {pipeline_mode = #tpu.pipeline_mode<synchronous>, transform_indices = @transform_4, window_bounds = array<i64: 32, 1>}, {transform_indices = @transform_5, window_bounds = array<i64: 1, 256, 32>}, {transform_indices = @transform_6, window_bounds = array<i64: 1, 256, 32>}, {transform_indices = @transform_7, window_bounds = array<i64: 1, 256, 32>}, {transform_indices = @transform_8, window_bounds = array<i64: 1, 256, 1>}]} {
    %c0 = arith.constant 0 : index
    %c0_0 = arith.constant 0 : index
    %c0_1 = arith.constant 0 : index
    %0 = vector.load %arg2[%c0, %c0_0, %c0_1] : memref<1x256x32xbf16, #tpu.memory_space<vmem>>, vector<1x256x32xbf16>
    %1 = vector.shape_cast %0 : vector<1x256x32xbf16> to vector<256x32xbf16>
    %c0_2 = arith.constant 0 : index
    %c0_3 = arith.constant 0 : index
    %2 = vector.load %arg3[%c0_2, %c0_3] : memref<32x32xbf16, #tpu.memory_space<vmem>>, vector<32x32xbf16>
    %cst = arith.constant dense<0.000000e+00> : vector<256x32xf32>
    %3 = tpu.matmul %1, %2, %cst {dimension_numbers = #tpu.dot_dimension_numbers<[1], [0], [0], [1], [0, 0, 1, 1], [], []>} : vector<256x32xbf16>, vector<32x32xbf16>, vector<256x32xf32> -> vector<256x32xf32>
    %4 = arith.truncf %3 : vector<256x32xf32> to vector<256x32xbf16>
    %c0_4 = arith.constant 0 : index
    %c0_5 = arith.constant 0 : index
    %c0_6 = arith.constant 0 : index
    %5 = vector.load %arg7[%c0_4, %c0_5, %c0_6] : memref<1x256x32xbf16, #tpu.memory_space<vmem>>, vector<1x256x32xbf16>
    %6 = vector.shape_cast %5 : vector<1x256x32xbf16> to vector<256x32xbf16>
    %7 = vector.shape_cast %4 : vector<256x32xbf16> to vector<1x256x32xbf16>
    tpu.vector_store %arg7[%c0_4, %c0_5, %c0_6], %7 {strides = array<i32>} : memref<1x256x32xbf16, #tpu.memory_space<vmem>>, vector<1x256x32xbf16>,
    %c0_7 = arith.constant 0 : index
    %c0_8 = arith.constant 0 : index
    %8 = vector.load %arg4[%c0_7, %c0_8] : memref<32x32xbf16, #tpu.memory_space<vmem>>, vector<32x32xbf16>
    %cst_9 = arith.constant dense<0.000000e+00> : vector<256x32xf32>
    %9 = tpu.matmul %1, %8, %cst_9 {dimension_numbers = #tpu.dot_dimension_numbers<[1], [0], [0], [1], [0, 0, 1, 1], [], []>} : vector<256x32xbf16>, vector<32x32xbf16>, vector<256x32xf32> -> vector<256x32xf32>
    %10 = arith.truncf %9 : vector<256x32xf32> to vector<256x32xbf16>
    %c0_10 = arith.constant 0 : index
    %c0_11 = arith.constant 0 : index
    %c0_12 = arith.constant 0 : index
    %11 = vector.load %arg8[%c0_10, %c0_11, %c0_12] : memref<1x256x32xbf16, #tpu.memory_space<vmem>>, vector<1x256x32xbf16>
    %12 = vector.shape_cast %11 : vector<1x256x32xbf16> to vector<256x32xbf16>
    %13 = vector.shape_cast %10 : vector<256x32xbf16> to vector<1x256x32xbf16>
    tpu.vector_store %arg8[%c0_10, %c0_11, %c0_12], %13 {strides = array<i32>} : memref<1x256x32xbf16, #tpu.memory_space<vmem>>, vector<1x256x32xbf16>,
    %c0_13 = arith.constant 0 : index
    %c0_14 = arith.constant 0 : index
    %14 = vector.load %arg5[%c0_13, %c0_14] : memref<32x32xbf16, #tpu.memory_space<vmem>>, vector<32x32xbf16>
    %cst_15 = arith.constant dense<0.000000e+00> : vector<256x32xf32>
    %15 = tpu.matmul %1, %14, %cst_15 {dimension_numbers = #tpu.dot_dimension_numbers<[1], [0], [0], [1], [0, 0, 1, 1], [], []>} : vector<256x32xbf16>, vector<32x32xbf16>, vector<256x32xf32> -> vector<256x32xf32>
    %16 = arith.truncf %15 : vector<256x32xf32> to vector<256x32xbf16>
    %c0_16 = arith.constant 0 : index
    %c0_17 = arith.constant 0 : index
    %c0_18 = arith.constant 0 : index
    %17 = vector.load %arg9[%c0_16, %c0_17, %c0_18] : memref<1x256x32xbf16, #tpu.memory_space<vmem>>, vector<1x256x32xbf16>
    %18 = vector.shape_cast %17 : vector<1x256x32xbf16> to vector<256x32xbf16>
    %19 = vector.shape_cast %16 : vector<256x32xbf16> to vector<1x256x32xbf16>
    tpu.vector_store %arg9[%c0_16, %c0_17, %c0_18], %19 {strides = array<i32>} : memref<1x256x32xbf16, #tpu.memory_space<vmem>>, vector<1x256x32xbf16>,
    %c0_19 = arith.constant 0 : index
    %c0_20 = arith.constant 0 : index
    %20 = vector.load %arg6[%c0_19, %c0_20] : memref<32x1xbf16, #tpu.memory_space<vmem>>, vector<32x1xbf16>
    %cst_21 = arith.constant dense<0.000000e+00> : vector<256x1xf32>
    %21 = tpu.matmul %1, %20, %cst_21 {dimension_numbers = #tpu.dot_dimension_numbers<[1], [0], [0], [1], [0, 0, 1, 1], [], []>} : vector<256x32xbf16>, vector<32x1xbf16>, vector<256x1xf32> -> vector<256x1xf32>
    %c0_22 = arith.constant 0 : index
    %c0_23 = arith.constant 0 : index
    %c0_24 = arith.constant 0 : index
    %22 = vector.load %arg10[%c0_22, %c0_23, %c0_24] : memref<1x256x1xf32, #tpu.memory_space<vmem>>, vector<1x256x1xf32>
    %23 = vector.shape_cast %22 : vector<1x256x1xf32> to vector<256x1xf32>
    %24 = vector.shape_cast %21 : vector<256x1xf32> to vector<1x256x1xf32>
    tpu.vector_store %arg10[%c0_22, %c0_23, %c0_24], %24 {strides = array<i32>} : memref<1x256x1xf32, #tpu.memory_space<vmem>>, vector<1x256x1xf32>,
    return
  }
  func.func @transform_0(%arg0: i32, %arg1: i32) -> (i32, i32, i32) {
    %c0_i32 = arith.constant 0 : i32
    %c0_i32_0 = arith.constant 0 : i32
    return %arg0, %arg1, %c0_i32 : i32, i32, i32
  }
  func.func @transform_1(%arg0: i32, %arg1: i32) -> (i32, i32) {
    %c0_i32 = arith.constant 0 : i32
    %c0_i32_0 = arith.constant 0 : i32
    %c0_i32_1 = arith.constant 0 : i32
    return %c0_i32, %c0_i32_0 : i32, i32
  }
  func.func @transform_2(%arg0: i32, %arg1: i32) -> (i32, i32) {
    %c0_i32 = arith.constant 0 : i32
    %c0_i32_0 = arith.constant 0 : i32
    %c0_i32_1 = arith.constant 0 : i32
    return %c0_i32, %c0_i32_0 : i32, i32
  }
  func.func @transform_3(%arg0: i32, %arg1: i32) -> (i32, i32) {
    %c0_i32 = arith.constant 0 : i32
    %c0_i32_0 = arith.constant 0 : i32
    %c0_i32_1 = arith.constant 0 : i32
    return %c0_i32, %c0_i32_0 : i32, i32
  }
  func.func @transform_4(%arg0: i32, %arg1: i32) -> (i32, i32) {
    %c0_i32 = arith.constant 0 : i32
    %c0_i32_0 = arith.constant 0 : i32
    %c0_i32_1 = arith.constant 0 : i32
    return %c0_i32, %c0_i32_0 : i32, i32
  }
  func.func @transform_5(%arg0: i32, %arg1: i32) -> (i32, i32, i32) {
    %c0_i32 = arith.constant 0 : i32
    %c0_i32_0 = arith.constant 0 : i32
    return %arg0, %arg1, %c0_i32 : i32, i32, i32
  }
  func.func @transform_6(%arg0: i32, %arg1: i32) -> (i32, i32, i32) {
    %c0_i32 = arith.constant 0 : i32
    %c0_i32_0 = arith.constant 0 : i32
    return %arg0, %arg1, %c0_i32 : i32, i32, i32
  }
  func.func @transform_7(%arg0: i32, %arg1: i32) -> (i32, i32, i32) {
    %c0_i32 = arith.constant 0 : i32
    %c0_i32_0 = arith.constant 0 : i32
    return %arg0, %arg1, %c0_i32 : i32, i32, i32
  }
  func.func @transform_8(%arg0: i32, %arg1: i32) -> (i32, i32, i32) {
    %c0_i32 = arith.constant 0 : i32
    %c0_i32_0 = arith.constant 0 : i32
    return %arg0, %arg1, %c0_i32 : i32, i32, i32
  }
}

module attributes {stable_mosaic.version = 11 : i64} {
  func.func @_proj_kernel(%arg0: i32, %arg1: i32, %arg2: memref<1x256x32xbf16, #tpu.memory_space<vmem>>, %arg3: memref<32x32xbf16, #tpu.memory_space<vmem>>, %arg4: memref<32x32xbf16, #tpu.memory_space<vmem>>, %arg5: memref<32x32xbf16, #tpu.memory_space<vmem>>, %arg6: memref<32x1xbf16, #tpu.memory_space<vmem>>, %arg7: memref<1x256x32xbf16, #tpu.memory_space<vmem>>, %arg8: memref<1x256x32xbf16, #tpu.memory_space<vmem>>, %arg9: memref<1x256x32xbf16, #tpu.memory_space<vmem>>, %arg10: memref<1x256x1xf32, #tpu.memory_space<vmem>>) attributes {dimension_semantics = [#tpu.dimension_semantics<parallel>, #tpu.dimension_semantics<parallel>], iteration_bounds = array<i64: 2, 1>, scalar_prefetch = 0 : i64, scratch_operands = 0 : i64, tpu.core_type = #tpu.core_type<tc>, window_params = [{transform_indices = @transform_0, window_bounds = array<i64: 1, 256, 32>}, {pipeline_mode = #tpu.pipeline_mode<synchronous>, transform_indices = @transform_1, window_bounds = array<i64: 32, 32>}, {pipeline_mode = #tpu.pipeline_mode<synchronous>, transform_indices = @transform_2, window_bounds = array<i64: 32, 32>}, {pipeline_mode = #tpu.pipeline_mode<synchronous>, transform_indices = @transform_3, window_bounds = array<i64: 32, 32>}, {pipeline_mode = #tpu.pipeline_mode<synchronous>, transform_indices = @transform_4, window_bounds = array<i64: 32, 1>}, {transform_indices = @transform_5, window_bounds = array<i64: 1, 256, 32>}, {transform_indices = @transform_6, window_bounds = array<i64: 1, 256, 32>}, {transform_indices = @transform_7, window_bounds = array<i64: 1, 256, 32>}, {transform_indices = @transform_8, window_bounds = array<i64: 1, 256, 1>}]} {
    %c0 = arith.constant 0 : index
    %c0_0 = arith.constant 0 : index
    %c0_1 = arith.constant 0 : index
    %0 = vector.load %arg2[%c0, %c0_0, %c0_1] : memref<1x256x32xbf16, #tpu.memory_space<vmem>>, vector<1x256x32xbf16>
    %1 = vector.shape_cast %0 : vector<1x256x32xbf16> to vector<256x32xbf16>
    %c0_2 = arith.constant 0 : index
    %c0_3 = arith.constant 0 : index
    %2 = vector.load %arg3[%c0_2, %c0_3] : memref<32x32xbf16, #tpu.memory_space<vmem>>, vector<32x32xbf16>
    %cst = arith.constant dense<0.000000e+00> : vector<256x32xf32>
    %3 = tpu.matmul %1, %2, %cst {dimension_numbers = #tpu.dot_dimension_numbers<[1], [0], [0], [1], [0, 0, 1, 1], [], []>} : vector<256x32xbf16>, vector<32x32xbf16>, vector<256x32xf32> -> vector<256x32xf32>
    %4 = arith.truncf %3 : vector<256x32xf32> to vector<256x32xbf16>
    %c0_4 = arith.constant 0 : index
    %c0_5 = arith.constant 0 : index
    %c0_6 = arith.constant 0 : index
    %5 = vector.load %arg7[%c0_4, %c0_5, %c0_6] : memref<1x256x32xbf16, #tpu.memory_space<vmem>>, vector<1x256x32xbf16>
    %6 = vector.shape_cast %5 : vector<1x256x32xbf16> to vector<256x32xbf16>
    %7 = vector.shape_cast %4 : vector<256x32xbf16> to vector<1x256x32xbf16>
    tpu.vector_store %arg7[%c0_4, %c0_5, %c0_6], %7 {strides = array<i32>} : memref<1x256x32xbf16, #tpu.memory_space<vmem>>, vector<1x256x32xbf16>,
    %c0_7 = arith.constant 0 : index
    %c0_8 = arith.constant 0 : index
    %8 = vector.load %arg4[%c0_7, %c0_8] : memref<32x32xbf16, #tpu.memory_space<vmem>>, vector<32x32xbf16>
    %cst_9 = arith.constant dense<0.000000e+00> : vector<256x32xf32>
    %9 = tpu.matmul %1, %8, %cst_9 {dimension_numbers = #tpu.dot_dimension_numbers<[1], [0], [0], [1], [0, 0, 1, 1], [], []>} : vector<256x32xbf16>, vector<32x32xbf16>, vector<256x32xf32> -> vector<256x32xf32>
    %10 = arith.truncf %9 : vector<256x32xf32> to vector<256x32xbf16>
    %c0_10 = arith.constant 0 : index
    %c0_11 = arith.constant 0 : index
    %c0_12 = arith.constant 0 : index
    %11 = vector.load %arg8[%c0_10, %c0_11, %c0_12] : memref<1x256x32xbf16, #tpu.memory_space<vmem>>, vector<1x256x32xbf16>
    %12 = vector.shape_cast %11 : vector<1x256x32xbf16> to vector<256x32xbf16>
    %13 = vector.shape_cast %10 : vector<256x32xbf16> to vector<1x256x32xbf16>
    tpu.vector_store %arg8[%c0_10, %c0_11, %c0_12], %13 {strides = array<i32>} : memref<1x256x32xbf16, #tpu.memory_space<vmem>>, vector<1x256x32xbf16>,
    %c0_13 = arith.constant 0 : index
    %c0_14 = arith.constant 0 : index
    %14 = vector.load %arg5[%c0_13, %c0_14] : memref<32x32xbf16, #tpu.memory_space<vmem>>, vector<32x32xbf16>
    %cst_15 = arith.constant dense<0.000000e+00> : vector<256x32xf32>
    %15 = tpu.matmul %1, %14, %cst_15 {dimension_numbers = #tpu.dot_dimension_numbers<[1], [0], [0], [1], [0, 0, 1, 1], [], []>} : vector<256x32xbf16>, vector<32x32xbf16>, vector<256x32xf32> -> vector<256x32xf32>
    %16 = arith.truncf %15 : vector<256x32xf32> to vector<256x32xbf16>
    %c0_16 = arith.constant 0 : index
    %c0_17 = arith.constant 0 : index
    %c0_18 = arith.constant 0 : index
    %17 = vector.load %arg9[%c0_16, %c0_17, %c0_18] : memref<1x256x32xbf16, #tpu.memory_space<vmem>>, vector<1x256x32xbf16>
    %18 = vector.shape_cast %17 : vector<1x256x32xbf16> to vector<256x32xbf16>
    %19 = vector.shape_cast %16 : vector<256x32xbf16> to vector<1x256x32xbf16>
    tpu.vector_store %arg9[%c0_16, %c0_17, %c0_18], %19 {strides = array<i32>} : memref<1x256x32xbf16, #tpu.memory_space<vmem>>, vector<1x256x32xbf16>,
    %c0_19 = arith.constant 0 : index
    %c0_20 = arith.constant 0 : index
    %20 = vector.load %arg6[%c0_19, %c0_20] : memref<32x1xbf16, #tpu.memory_space<vmem>>, vector<32x1xbf16>
    %cst_21 = arith.constant dense<0.000000e+00> : vector<256x1xf32>
    %21 = tpu.matmul %1, %20, %cst_21 {dimension_numbers = #tpu.dot_dimension_numbers<[1], [0], [0], [1], [0, 0, 1, 1], [], []>} : vector<256x32xbf16>, vector<32x1xbf16>, vector<256x1xf32> -> vector<256x1xf32>
    %c0_22 = arith.constant 0 : index
    %c0_23 = arith.constant 0 : index
    %c0_24 = arith.constant 0 : index
    %22 = vector.load %arg10[%c0_22, %c0_23, %c0_24] : memref<1x256x1xf32, #tpu.memory_space<vmem>>, vector<1x256x1xf32>
    %23 = vector.shape_cast %22 : vector<1x256x1xf32> to vector<256x1xf32>
    %24 = vector.shape_cast %21 : vector<256x1xf32> to vector<1x256x1xf32>
    tpu.vector_store %arg10[%c0_22, %c0_23, %c0_24], %24 {strides = array<i32>} : memref<1x256x1xf32, #tpu.memory_space<vmem>>, vector<1x256x1xf32>,
    return
  }
  func.func @transform_0(%arg0: i32, %arg1: i32) -> (i32, i32, i32) {
    %c0_i32 = arith.constant 0 : i32
    %c0_i32_0 = arith.constant 0 : i32
    return %arg0, %arg1, %c0_i32 : i32, i32, i32
  }
  func.func @transform_1(%arg0: i32, %arg1: i32) -> (i32, i32) {
    %c0_i32 = arith.constant 0 : i32
    %c0_i32_0 = arith.constant 0 : i32
    %c0_i32_1 = arith.constant 0 : i32
    return %c0_i32, %c0_i32_0 : i32, i32
  }
  func.func @transform_2(%arg0: i32, %arg1: i32) -> (i32, i32) {
    %c0_i32 = arith.constant 0 : i32
    %c0_i32_0 = arith.constant 0 : i32
    %c0_i32_1 = arith.constant 0 : i32
    return %c0_i32, %c0_i32_0 : i32, i32
  }
  func.func @transform_3(%arg0: i32, %arg1: i32) -> (i32, i32) {
    %c0_i32 = arith.constant 0 : i32
    %c0_i32_0 = arith.constant 0 : i32
    %c0_i32_1 = arith.constant 0 : i32
    return %c0_i32, %c0_i32_0 : i32, i32
  }
  func.func @transform_4(%arg0: i32, %arg1: i32) -> (i32, i32) {
    %c0_i32 = arith.constant 0 : i32
    %c0_i32_0 = arith.constant 0 : i32
    %c0_i32_1 = arith.constant 0 : i32
    return %c0_i32, %c0_i32_0 : i32, i32
  }
  func.func @transform_5(%arg0: i32, %arg1: i32) -> (i32, i32, i32) {
    %c0_i32 = arith.constant 0 : i32
    %c0_i32_0 = arith.constant 0 : i32
    return %arg0, %arg1, %c0_i32 : i32, i32, i32
  }
  func.func @transform_6(%arg0: i32, %arg1: i32) -> (i32, i32, i32) {
    %c0_i32 = arith.constant 0 : i32
    %c0_i32_0 = arith.constant 0 : i32
    return %arg0, %arg1, %c0_i32 : i32, i32, i32
  }
  func.func @transform_7(%arg0: i32, %arg1: i32) -> (i32, i32, i32) {
    %c0_i32 = arith.constant 0 : i32
    %c0_i32_0 = arith.constant 0 : i32
    return %arg0, %arg1, %c0_i32 : i32, i32, i32
  }
  func.func @transform_8(%arg0: i32, %arg1: i32) -> (i32, i32, i32) {
    %c0_i32 = arith.constant 0 : i32
    %c0_i32_0 = arith.constant 0 : i32
    return %arg0, %arg1, %c0_i32 : i32, i32, i32
  }
}

</mosaic_0001>

<llo_original>
// kernel: tpu_custom_call.1
$region0: #{tpu_custom_call.1}
  #allocation0 [shape = 'u32[]', space=smem, size = 0x4, offset = 0x4, fixed_abs, tag = 'smem constant byte address 0x4 - core index']
  #allocation1 [shape = 'u32[72,128]{1,0:T(1,128)}', space=vmem, size = 0x9000, scoped, tag = 'internal scratch']
  %s0 = inlined_call_operand.vmem [shape: bf16[2,256,32], index: 0, kind: input, shape index: {}]
  %s1 = inlined_call_operand.vmem [shape: bf16[32,32], index: 1, kind: input, shape index: {}]
  %s2 = inlined_call_operand.vmem [shape: bf16[32,32], index: 2, kind: input, shape index: {}]
  %s3 = inlined_call_operand.vmem [shape: bf16[32,32], index: 3, kind: input, shape index: {}]
  %s4 = inlined_call_operand.vmem [shape: bf16[32,1], index: 4, kind: input, shape index: {}]
  %s5 = inlined_call_operand.vmem [shape: bf16[2,256,32], index: 5, kind: output, shape index: {0}]
  %s6 = inlined_call_operand.vmem [shape: bf16[2,256,32], index: 6, kind: output, shape index: {1}]
  %s7 = inlined_call_operand.vmem [shape: bf16[2,256,32], index: 7, kind: output, shape index: {2}]
  %s8 = inlined_call_operand.vmem [shape: f32[2,256,1], index: 8, kind: output, shape index: {3}]
  %9 = xla_tuple %s5, %s6, %s7, %s8
  %s10 = sld [smem:[#allocation0]]
  $region77: #{tpu_custom_call.1} parent=0
    _
  %s12 = ssub.s32 1, %s10
  %s13 = scalar_select 0, %s12, %s10
  loop: start=0, step=1, limit=4
  $region2: #{tpu_custom_call.1} parent=0 // loop_pre_header
    _
  $region3: #{tpu_custom_call.1} parent=0 // loop_header
    %s15 = sphi 0, %s19
    %p16 = scmp.ge.s32.totalorder %s15, 4
    %s22 = sphi 0, %s34
    %s23 = sphi 0, %s30
    %s24 = sphi 0, %s22
    %s25 = sphi 0, %s23
    %s26 = sphi 0, %s24
    %s27 = sphi 0, %s25
    %s39 = sphi 0, %s41
    %s42 = sphi 0, %s39
    %s43 = sphi 0, %s42
    %s59 = sphi 0, %s43
    %s63 = sphi 0, %s63
    %s65 = sphi 0, %s63
    %s66 = sphi 0, %s65
    %s80 = sphi 0, %s66
    %s84 = sphi 0, %s84
    %s86 = sphi 0, %s84
    %s87 = sphi 0, %s86
    %s101 = sphi 0, %s87
    %s105 = sphi 0, %s105
    %s107 = sphi 0, %s105
    %s108 = sphi 0, %s107
    %s122 = sphi 0, %s108
    %s126 = sphi 0, %s126
    %s128 = sphi 0, %s126
    %s129 = sphi 0, %s128
    %s143 = sphi 0, %s129
    %s151 = sphi 0, %s153
    %s154 = sphi 0, %s151
    %s155 = sphi 0, %s154
    %s171 = sphi 0, %s155
    %s179 = sphi 0, %s181
    %s182 = sphi 0, %s179
    %s183 = sphi 0, %s182
    %s199 = sphi 0, %s183
    %s207 = sphi 0, %s209
    %s210 = sphi 0, %s207
    %s211 = sphi 0, %s210
    %s227 = sphi 0, %s211
    %s235 = sphi 0, %s237
    %s238 = sphi 0, %s235
    %s239 = sphi 0, %s238
    %s255 = sphi 0, %s239
  $region4: #{tpu_custom_call.1} parent=0 // loop_header_branch
    %18 = sbr.rel (%p16) target = $region8
  $region5: #{tpu_custom_call.1} parent=0 // loop_body
    %s20 = ssub.s32 %s15, 1
    %s21 = ssub.s32 %s15, 2
    %s28 = sadd.s32 1, %s23
    %p29 = scmp.ge.s32.totalorder %s28, 1
    %s30 = scalar_select %p29, 0, %s28
    %s31 = sadd.s32 1, %s22
    %s32 = scalar_select %p29, %s31, %s22
    %p33 = scmp.ge.s32.totalorder %s32, 2
    %s34 = scalar_select %p33, 0, %s32
    %s35 = ssub.s32 %s22, %s34
    %s36 = ssub.s32 %s23, %s30
    %s37 = sor.u32 %s35, %s36
    %p38 = scmp.eq.s32.totalorder %s37, 0
    %s40 = sadd.s32 %s39, 1
    %s41 = scalar_select %p38, %s39, %s40
    %p44 = pneg %p38
    %p45 = scmp.eq.s32.totalorder %s15, 1
    %p46 = por %p44, %p45
    %p47 = scmp.ne.s32.totalorder %s39, %s42
    %p48 = scmp.eq.s32.totalorder %s15, 0
    %p49 = por %p47, %p48
    %p50 = scmp.ne.s32.totalorder %s39, %s42
    %p51 = scmp.eq.s32.totalorder %s20, 1
    %p52 = por %p50, %p51
    %p53 = scmp.ne.s32.totalorder %s42, %s43
    %p54 = scmp.eq.s32.totalorder %s20, 0
    %p55 = por %p53, %p54
    %p56 = scmp.ne.s32.totalorder %s42, %s43
    %p57 = scmp.eq.s32.totalorder %s21, 1
    %p58 = por %p56, %p57
    %p60 = scmp.ne.s32.totalorder %s43, %s59
    %p61 = scmp.eq.s32.totalorder %s21, 0
    %p62 = por %p60, %p61
    %s64 = sadd.s32 %s63, 1
    %p67 = scmp.eq.s32.totalorder %s15, 1
    %p68 = scmp.ne.s32.totalorder %s63, %s65
    %p69 = scmp.eq.s32.totalorder %s15, 0
    %p70 = por %p68, %p69
    %p71 = scmp.ne.s32.totalorder %s63, %s65
    %p72 = scmp.eq.s32.totalorder %s20, 1
    %p73 = por %p71, %p72
    %p74 = scmp.ne.s32.totalorder %s65, %s66
    %p75 = scmp.eq.s32.totalorder %s20, 0
    %p76 = por %p74, %p75
    %p77 = scmp.ne.s32.totalorder %s65, %s66
    %p78 = scmp.eq.s32.totalorder %s21, 1
    %p79 = por %p77, %p78
    %p81 = scmp.ne.s32.totalorder %s66, %s80
    %p82 = scmp.eq.s32.totalorder %s21, 0
    %p83 = por %p81, %p82
    %s85 = sadd.s32 %s84, 1
    %p88 = scmp.eq.s32.totalorder %s15, 1
    %p89 = scmp.ne.s32.totalorder %s84, %s86
    %p90 = scmp.eq.s32.totalorder %s15, 0
    %p91 = por %p89, %p90
    %p92 = scmp.ne.s32.totalorder %s84, %s86
    %p93 = scmp.eq.s32.totalorder %s20, 1
    %p94 = por %p92, %p93
    %p95 = scmp.ne.s32.totalorder %s86, %s87
    %p96 = scmp.eq.s32.totalorder %s20, 0
    %p97 = por %p95, %p96
    %p98 = scmp.ne.s32.totalorder %s86, %s87
    %p99 = scmp.eq.s32.totalorder %s21, 1
    %p100 = por %p98, %p99
    %p102 = scmp.ne.s32.totalorder %s87, %s101
    %p103 = scmp.eq.s32.totalorder %s21, 0
    %p104 = por %p102, %p103
    %s106 = sadd.s32 %s105, 1
    %p109 = scmp.eq.s32.totalorder %s15, 1
    %p110 = scmp.ne.s32.totalorder %s105, %s107
    %p111 = scmp.eq.s32.totalorder %s15, 0
    %p112 = por %p110, %p111
    %p113 = scmp.ne.s32.totalorder %s105, %s107
    %p114 = scmp.eq.s32.totalorder %s20, 1
    %p115 = por %p113, %p114
    %p116 = scmp.ne.s32.totalorder %s107, %s108
    %p117 = scmp.eq.s32.totalorder %s20, 0
    %p118 = por %p116, %p117
    %p119 = scmp.ne.s32.totalorder %s107, %s108
    %p120 = scmp.eq.s32.totalorder %s21, 1
    %p121 = por %p119, %p120
    %p123 = scmp.ne.s32.totalorder %s108, %s122
    %p124 = scmp.eq.s32.totalorder %s21, 0
    %p125 = por %p123, %p124
    %s127 = sadd.s32 %s126, 1
    %p130 = scmp.eq.s32.totalorder %s15, 1
    %p131 = scmp.ne.s32.totalorder %s126, %s128
    %p132 = scmp.eq.s32.totalorder %s15, 0
    %p133 = por %p131, %p132
    %p134 = scmp.ne.s32.totalorder %s126, %s128
    %p135 = scmp.eq.s32.totalorder %s20, 1
    %p136 = por %p134, %p135
    %p137 = scmp.ne.s32.totalorder %s128, %s129
    %p138 = scmp.eq.s32.totalorder %s20, 0
    %p139 = por %p137, %p138
    %p140 = scmp.ne.s32.totalorder %s128, %s129
    %p141 = scmp.eq.s32.totalorder %s21, 1
    %p142 = por %p140, %p141
    %p144 = scmp.ne.s32.totalorder %s129, %s143
    %p145 = scmp.eq.s32.totalorder %s21, 0
    %p146 = por %p144, %p145
    %s147 = ssub.s32 %s22, %s34
    %s148 = ssub.s32 %s23, %s30
    %s149 = sor.u32 %s147, %s148
    %p150 = scmp.eq.s32.totalorder %s149, 0
    %s152 = sadd.s32 %s151, 1
    %s153 = scalar_select %p150, %s151, %s152
    %p156 = pneg %p150
    %p157 = scmp.eq.s32.totalorder %s15, 1
    %p158 = por %p156, %p157
    %p159 = scmp.ne.s32.totalorder %s151, %s154
    %p160 = scmp.eq.s32.totalorder %s15, 0
    %p161 = por %p159, %p160
    %p162 = scmp.ne.s32.totalorder %s151, %s154
    %p163 = scmp.eq.s32.totalorder %s20, 1
    %p164 = por %p162, %p163
    %p165 = scmp.ne.s32.totalorder %s154, %s155
    %p166 = scmp.eq.s32.totalorder %s20, 0
    %p167 = por %p165, %p166
    %p168 = scmp.ne.s32.totalorder %s154, %s155
    %p169 = scmp.eq.s32.totalorder %s21, 1
    %p170 = por %p168, %p169
    %p172 = scmp.ne.s32.totalorder %s155, %s171
    %p173 = scmp.eq.s32.totalorder %s21, 0
    %p174 = por %p172, %p173
    %s175 = ssub.s32 %s22, %s34
    %s176 = ssub.s32 %s23, %s30
    %s177 = sor.u32 %s175, %s176
    %p178 = scmp.eq.s32.totalorder %s177, 0
    %s180 = sadd.s32 %s179, 1
    %s181 = scalar_select %p178, %s179, %s180
    %p184 = pneg %p178
    %p185 = scmp.eq.s32.totalorder %s15, 1
    %p186 = por %p184, %p185
    %p187 = scmp.ne.s32.totalorder %s179, %s182
    %p188 = scmp.eq.s32.totalorder %s15, 0
    %p189 = por %p187, %p188
    %p190 = scmp.ne.s32.totalorder %s179, %s182
    %p191 = scmp.eq.s32.totalorder %s20, 1
    %p192 = por %p190, %p191
    %p193 = scmp.ne.s32.totalorder %s182, %s183
    %p194 = scmp.eq.s32.totalorder %s20, 0
    %p195 = por %p193, %p194
    %p196 = scmp.ne.s32.totalorder %s182, %s183
    %p197 = scmp.eq.s32.totalorder %s21, 1
    %p198 = por %p196, %p197
    %p200 = scmp.ne.s32.totalorder %s183, %s199
    %p201 = scmp.eq.s32.totalorder %s21, 0
    %p202 = por %p200, %p201
    %s203 = ssub.s32 %s22, %s34
    %s204 = ssub.s32 %s23, %s30
    %s205 = sor.u32 %s203, %s204
    %p206 = scmp.eq.s32.totalorder %s205, 0
    %s208 = sadd.s32 %s207, 1
    %s209 = scalar_select %p206, %s207, %s208
    %p212 = pneg %p206
    %p213 = scmp.eq.s32.totalorder %s15, 1
    %p214 = por %p212, %p213
    %p215 = scmp.ne.s32.totalorder %s207, %s210
    %p216 = scmp.eq.s32.totalorder %s15, 0
    %p217 = por %p215, %p216
    %p218 = scmp.ne.s32.totalorder %s207, %s210
    %p219 = scmp.eq.s32.totalorder %s20, 1
    %p220 = por %p218, %p219
    %p221 = scmp.ne.s32.totalorder %s210, %s211
    %p222 = scmp.eq.s32.totalorder %s20, 0
    %p223 = por %p221, %p222
    %p224 = scmp.ne.s32.totalorder %s210, %s211
    %p225 = scmp.eq.s32.totalorder %s21, 1
    %p226 = por %p224, %p225
    %p228 = scmp.ne.s32.totalorder %s211, %s227
    %p229 = scmp.eq.s32.totalorder %s21, 0
    %p230 = por %p228, %p229
    %s231 = ssub.s32 %s22, %s34
    %s232 = ssub.s32 %s23, %s30
    %s233 = sor.u32 %s231, %s232
    %p234 = scmp.eq.s32.totalorder %s233, 0
    %s236 = sadd.s32 %s235, 1
    %s237 = scalar_select %p234, %s235, %s236
    %p240 = pneg %p234
    %p241 = scmp.eq.s32.totalorder %s15, 1
    %p242 = por %p240, %p241
    %p243 = scmp.ne.s32.totalorder %s235, %s238
    %p244 = scmp.eq.s32.totalorder %s15, 0
    %p245 = por %p243, %p244
    %p246 = scmp.ne.s32.totalorder %s235, %s238
    %p247 = scmp.eq.s32.totalorder %s20, 1
    %p248 = por %p246, %p247
    %p249 = scmp.ne.s32.totalorder %s238, %s239
    %p250 = scmp.eq.s32.totalorder %s20, 0
    %p251 = por %p249, %p250
    %p252 = scmp.ne.s32.totalorder %s238, %s239
    %p253 = scmp.eq.s32.totalorder %s21, 1
    %p254 = por %p252, %p253
    %p256 = scmp.ne.s32.totalorder %s239, %s255
    %p257 = scmp.eq.s32.totalorder %s21, 0
    %p258 = por %p256, %p257
    %p259 = scmp.le.s32.totalorder 1, %s15
    %p260 = scmp.lt.s32.totalorder %s15, 3
    %p261 = pnand %p259, %p260
    %p262 = pneg %p261
    // Predicated region
    $region9: #{tpu_custom_call.1} parent=5 // pred_check
      _
    $region10: #{tpu_custom_call.1} parent=5 // pred_check_branch
      %264 = sbr.rel (%p261) target = $region12
    $region11: #{tpu_custom_call.1} parent=5 // pred_region
      %s265 = ssub.s32 %s15, 1
      // Predicated region
      $region13: #{tpu_custom_call.1} parent=11 // pred_check
        %p266 = pneg %p76
      $region14: #{tpu_custom_call.1} parent=11 // pred_check_branch
        %268 = sbr.rel (%p266) target = $region16
      $region15: #{tpu_custom_call.1} parent=11 // pred_region
        _
      $region16: #{tpu_custom_call.1} parent=11 // pred_fallthru
        _
      // Predicated region
      $region17: #{tpu_custom_call.1} parent=11 // pred_check
        %p269 = pneg %p97
      $region18: #{tpu_custom_call.1} parent=11 // pred_check_branch
        %271 = sbr.rel (%p269) target = $region20
      $region19: #{tpu_custom_call.1} parent=11 // pred_region
        _
      $region20: #{tpu_custom_call.1} parent=11 // pred_fallthru
        _
      // Predicated region
      $region21: #{tpu_custom_call.1} parent=11 // pred_check
        %p272 = pneg %p118
      $region22: #{tpu_custom_call.1} parent=11 // pred_check_branch
        %274 = sbr.rel (%p272) target = $region24
      $region23: #{tpu_custom_call.1} parent=11 // pred_region
        _
      $region24: #{tpu_custom_call.1} parent=11 // pred_fallthru
        _
      // Predicated region
      $region25: #{tpu_custom_call.1} parent=11 // pred_check
        %p275 = pneg %p139
      $region26: #{tpu_custom_call.1} parent=11 // pred_check_branch
        %277 = sbr.rel (%p275) target = $region28
      $region27: #{tpu_custom_call.1} parent=11 // pred_region
        _
      $region28: #{tpu_custom_call.1} parent=11 // pred_fallthru
        _
    $region12: #{tpu_custom_call.1} parent=5 // pred_fallthru
      _
    %p278 = scmp.lt.s32.totalorder %s15, 2
    // Predicated region
    $region29: #{tpu_custom_call.1} parent=5 // pred_check
      %p279 = pneg %p278
    $region30: #{tpu_custom_call.1} parent=5 // pred_check_branch
      %281 = sbr.rel (%p279) target = $region32
    $region31: #{tpu_custom_call.1} parent=5 // pred_region
      // Predicated region
      $region33: #{tpu_custom_call.1} parent=31 // pred_check
        %p282 = pneg %p49
      $region34: #{tpu_custom_call.1} parent=31 // pred_check_branch
        %284 = sbr.rel (%p282) target = $region36
      $region35: #{tpu_custom_call.1} parent=31 // pred_region
        %s285 = smul.u32 32, %s23
        %p286 = scmp.lt.s32.totalorder %s22, 1
        %s287 = scalar_select %p286, %s22, 1
        %p288 = scmp.lt.s32.totalorder %s285, 31
        %s289 = scalar_select %p288, %s285, 31
        %s290 = smul.addr %s287, 32
        %s291 = sadd.s32 %s289, %s290
        %s292 = smul.addr %s291, 4
        %s293 = scalar_lea.vmem %s0, %s292
        %s294 = smul.u32 32, %s23
      $region36: #{tpu_custom_call.1} parent=31 // pred_fallthru
        _
    $region32: #{tpu_custom_call.1} parent=5 // pred_fallthru
      _
    %p295 = scmp.le.s32.totalorder 1, %s15
    %p296 = scmp.lt.s32.totalorder %s15, 3
    %p297 = pnand %p295, %p296
    %p298 = pneg %p297
    // Predicated region
    $region37: #{tpu_custom_call.1} parent=5 // pred_check
      _
    $region38: #{tpu_custom_call.1} parent=5 // pred_check_branch
      %300 = sbr.rel (%p297) target = $region40
    $region39: #{tpu_custom_call.1} parent=5 // pred_region
      %s301 = ssub.s32 %s15, 1
      %s302 = smul.u32 32, %s25
      %p303 = scmp.lt.s32.totalorder %s24, 1
      %s304 = scalar_select %p303, %s24, 1
      %p305 = scmp.lt.s32.totalorder %s302, 31
      %s306 = scalar_select %p305, %s302, 31
      %s307 = smul.addr %s304, 32
      %s308 = sadd.s32 %s306, %s307
      %s309 = smul.addr %s308, 4
      %s310 = scalar_lea.vmem %s0, %s309
      %p311 = pneg %p55
      %p312 = pneg %p52
      %p313 = pneg %p76
      %p314 = pneg %p73
      %p315 = pneg %p97
      %p316 = pneg %p94
      %p317 = pneg %p118
      %p318 = pneg %p115
      %p319 = pneg %p139
      %p320 = pneg %p136
      %p321 = pneg %p167
      %p322 = pneg %p164
      %s323 = smul.u32 32, %s25
      %p324 = scmp.lt.s32.totalorder %s24, 1
      %s325 = scalar_select %p324, %s24, 1
      %p326 = scmp.lt.s32.totalorder %s323, 31
      %s327 = scalar_select %p326, %s323, 31
      %s328 = smul.addr %s325, 32
      %s329 = sadd.s32 %s327, %s328
      %s330 = smul.addr %s329, 4
      %s331 = scalar_lea.vmem %s5, %s330
      %p332 = pneg %p195
      %p333 = pneg %p192
      %s334 = smul.u32 32, %s25
      %p335 = scmp.lt.s32.totalorder %s24, 1
      %s336 = scalar_select %p335, %s24, 1
      %p337 = scmp.lt.s32.totalorder %s334, 31
      %s338 = scalar_select %p337, %s334, 31
      %s339 = smul.addr %s336, 32
      %s340 = sadd.s32 %s338, %s339
      %s341 = smul.addr %s340, 4
      %s342 = scalar_lea.vmem %s6, %s341
      %p343 = pneg %p223
      %p344 = pneg %p220
      %s345 = smul.u32 32, %s25
      %p346 = scmp.lt.s32.totalorder %s24, 1
      %s347 = scalar_select %p346, %s24, 1
      %p348 = scmp.lt.s32.totalorder %s345, 31
      %s349 = scalar_select %p348, %s345, 31
      %s350 = smul.addr %s347, 32
      %s351 = sadd.s32 %s349, %s350
      %s352 = smul.addr %s351, 4
      %s353 = scalar_lea.vmem %s7, %s352
      %p354 = pneg %p251
      %p355 = pneg %p248
      %s356 = smul.u32 32, %s25
      %p357 = scmp.lt.s32.totalorder %s24, 1
      %s358 = scalar_select %p357, %s24, 1
      %p359 = scmp.lt.s32.totalorder %s356, 31
      %s360 = scalar_select %p359, %s356, 31
      %s361 = smul.addr %s358, 32
      %s362 = sadd.s32 %s360, %s361
      %s363 = smul.addr %s362, 8
      %s364 = scalar_lea.vmem %s8, %s363
      %s365 = smul.u32 32, %s25
      %p366 = scmp.lt.s32.totalorder %s24, 1
      %s367 = scalar_select %p366, %s24, 1
      %p368 = scmp.lt.s32.totalorder %s365, 31
      %s369 = scalar_select %p368, %s365, 31
      %s370 = smul.addr %s367, 32
      %s371 = sadd.s32 %s369, %s370
      %s372 = smul.addr %s371, 4
      %s373 = scalar_lea.vmem %s0, %s372
      %s374 = smul.u32 32, %s25
      %s375 = smul.u32 32, %s25
      %p376 = scmp.lt.s32.totalorder %s24, 1
      %s377 = scalar_select %p376, %s24, 1
      %p378 = scmp.lt.s32.totalorder %s375, 31
      %s379 = scalar_select %p378, %s375, 31
      %s380 = smul.addr %s377, 32
      %s381 = sadd.s32 %s379, %s380
      %s382 = smul.addr %s381, 4
      %s383 = scalar_lea.vmem %s5, %s382
      %s384 = smul.u32 32, %s25
      %s385 = smul.u32 32, %s25
      %p386 = scmp.lt.s32.totalorder %s24, 1
      %s387 = scalar_select %p386, %s24, 1
      %p388 = scmp.lt.s32.totalorder %s385, 31
      %s389 = scalar_select %p388, %s385, 31
      %s390 = smul.addr %s387, 32
      %s391 = sadd.s32 %s389, %s390
      %s392 = smul.addr %s391, 4
      %s393 = scalar_lea.vmem %s6, %s392
      %s394 = smul.u32 32, %s25
      %s395 = smul.u32 32, %s25
      %p396 = scmp.lt.s32.totalorder %s24, 1
      %s397 = scalar_select %p396, %s24, 1
      %p398 = scmp.lt.s32.totalorder %s395, 31
      %s399 = scalar_select %p398, %s395, 31
      %s400 = smul.addr %s397, 32
      %s401 = sadd.s32 %s399, %s400
      %s402 = smul.addr %s401, 4
      %s403 = scalar_lea.vmem %s7, %s402
      %s404 = smul.u32 32, %s25
      %s405 = smul.u32 32, %s25
      %p406 = scmp.lt.s32.totalorder %s24, 1
      %s407 = scalar_select %p406, %s24, 1
      %p408 = scmp.lt.s32.totalorder %s405, 31
      %s409 = scalar_select %p408, %s405, 31
      %s410 = smul.addr %s407, 32
      %s411 = sadd.s32 %s409, %s410
      %s412 = smul.addr %s411, 8
      %s413 = scalar_lea.vmem %s8, %s412
      %s414 = smul.u32 32, %s25
      %v416 = vld [vmem:[%s373] sm:$0xf]
      %v417 = vld [vmem:[%s373 + $0x4] sm:$0xf]
      %v418 = vld [vmem:[%s373 + $0x8] sm:$0xf]
      %v419 = vld [vmem:[%s373 + $0xc] sm:$0xf]
      %v420 = vld [vmem:[%s373 + $0x10] sm:$0xf]
      %v421 = vld [vmem:[%s373 + $0x14] sm:$0xf]
      %v422 = vld [vmem:[%s373 + $0x18] sm:$0xf]
      %v423 = vld [vmem:[%s373 + $0x1c] sm:$0xf]
      %v424 = vld [vmem:[%s373 + $0x20] sm:$0xf]
      %v425 = vld [vmem:[%s373 + $0x24] sm:$0xf]
      %v426 = vld [vmem:[%s373 + $0x28] sm:$0xf]
      %v427 = vld [vmem:[%s373 + $0x2c] sm:$0xf]
      %v428 = vld [vmem:[%s373 + $0x30] sm:$0xf]
      %v429 = vld [vmem:[%s373 + $0x34] sm:$0xf]
      %v430 = vld [vmem:[%s373 + $0x38] sm:$0xf]
      %v431 = vld [vmem:[%s373 + $0x3c] sm:$0xf]
      %v432 = vld [vmem:[%s373 + $0x40] sm:$0xf]
      %v433 = vld [vmem:[%s373 + $0x44] sm:$0xf]
      %v434 = vld [vmem:[%s373 + $0x48] sm:$0xf]
      %v435 = vld [vmem:[%s373 + $0x4c] sm:$0xf]
      %v436 = vld [vmem:[%s373 + $0x50] sm:$0xf]
      %v437 = vld [vmem:[%s373 + $0x54] sm:$0xf]
      %v438 = vld [vmem:[%s373 + $0x58] sm:$0xf]
      %v439 = vld [vmem:[%s373 + $0x5c] sm:$0xf]
      %v440 = vld [vmem:[%s373 + $0x60] sm:$0xf]
      %v441 = vld [vmem:[%s373 + $0x64] sm:$0xf]
      %v442 = vld [vmem:[%s373 + $0x68] sm:$0xf]
      %v443 = vld [vmem:[%s373 + $0x6c] sm:$0xf]
      %v444 = vld [vmem:[%s373 + $0x70] sm:$0xf]
      %v445 = vld [vmem:[%s373 + $0x74] sm:$0xf]
      %v446 = vld [vmem:[%s373 + $0x78] sm:$0xf]
      %v447 = vld [vmem:[%s373 + $0x7c] sm:$0xf]
      %v448 = vld [vmem:[%s1] sm:$0xf]
      %v449 = vld [vmem:[%s1 + $0x4] sm:$0xf]
      %v450 = vld [vmem:[%s1 + $0x8] sm:$0xf]
      %v451 = vld [vmem:[%s1 + $0xc] sm:$0xf]
      %v484 = vunpack.c.l.b16 %v416
      %v485 = vunpack.c.l.b16 %v417
      %v486 = vunpack.c.l.b16 %v418
      %v487 = vunpack.c.l.b16 %v419
      %v488 = vunpack.c.l.b16 %v420
      %v489 = vunpack.c.l.b16 %v421
      %v490 = vunpack.c.l.b16 %v422
      %v491 = vunpack.c.l.b16 %v423
      %v492 = vunpack.c.l.b16 %v424
      %v493 = vunpack.c.l.b16 %v425
      %v494 = vunpack.c.l.b16 %v426
      %v495 = vunpack.c.l.b16 %v427
      %v496 = vunpack.c.l.b16 %v428
      %v497 = vunpack.c.l.b16 %v429
      %v498 = vunpack.c.l.b16 %v430
      %v499 = vunpack.c.l.b16 %v431
      %v500 = vunpack.c.l.b16 %v432
      %v501 = vunpack.c.l.b16 %v433
      %v502 = vunpack.c.l.b16 %v434
      %v503 = vunpack.c.l.b16 %v435
      %v504 = vunpack.c.l.b16 %v436
      %v505 = vunpack.c.l.b16 %v437
      %v506 = vunpack.c.l.b16 %v438
      %v507 = vunpack.c.l.b16 %v439
      %v508 = vunpack.c.l.b16 %v440
      %v509 = vunpack.c.l.b16 %v441
      %v510 = vunpack.c.l.b16 %v442
      %v511 = vunpack.c.l.b16 %v443
      %v512 = vunpack.c.l.b16 %v444
      %v513 = vunpack.c.l.b16 %v445
      %v514 = vunpack.c.l.b16 %v446
      %v515 = vunpack.c.l.b16 %v447
      %v516 = vpack.c.b16 %v485, %v484
      %v517 = vpack.c.b16 %v487, %v486
      %v518 = vpack.c.b16 %v489, %v488
      %v519 = vpack.c.b16 %v491, %v490
      %v520 = vpack.c.b16 %v493, %v492
      %v521 = vpack.c.b16 %v495, %v494
      %v522 = vpack.c.b16 %v497, %v496
      %v523 = vpack.c.b16 %v499, %v498
      %v524 = vpack.c.b16 %v501, %v500
      %v525 = vpack.c.b16 %v503, %v502
      %v526 = vpack.c.b16 %v505, %v504
      %v527 = vpack.c.b16 %v507, %v506
      %v528 = vpack.c.b16 %v509, %v508
      %v529 = vpack.c.b16 %v511, %v510
      %v530 = vpack.c.b16 %v513, %v512
      %v531 = vpack.c.b16 %v515, %v514
      %v536 = vunpack.c.l.b16 %v448
      %v537 = vunpack.c.l.b16 %v449
      %v538 = vunpack.c.l.b16 %v450
      %v539 = vunpack.c.l.b16 %v451
      %v540 = vpack.c.b16 %v537, %v536
      %v541 = vpack.c.b16 %v539, %v538
      %vm544 = vcmask 261120
      %v546 = vsel %vm544, %v516, 0
      %v549 = vsel %vm544, %v517, 0
      %v552 = vsel %vm544, %v518, 0
      %v555 = vsel %vm544, %v519, 0
      %v558 = vsel %vm544, %v520, 0
      %v561 = vsel %vm544, %v521, 0
      %v564 = vsel %vm544, %v522, 0
      %v567 = vsel %vm544, %v523, 0
      %v570 = vsel %vm544, %v524, 0
      %v573 = vsel %vm544, %v525, 0
      %v576 = vsel %vm544, %v526, 0
      %v579 = vsel %vm544, %v527, 0
      %v582 = vsel %vm544, %v528, 0
      %v585 = vsel %vm544, %v529, 0
      %v588 = vsel %vm544, %v530, 0
      %v591 = vsel %vm544, %v531, 0
      %593 = vmatpush.bf16.msra.mxu0 0
      %594 = vmatpush.bf16.msra.mxu0 0
      %595 = vmatpush.bf16.msra.mxu0 0
      %596 = vmatpush.bf16.msra.mxu0 0
      %597 = vmatpush.bf16.msra.mxu0 0
      %598 = vmatpush.bf16.msra.mxu0 0
      %599 = vmatpush.bf16.msra.mxu0 %v541
      %600 = vmatpush.bf16.msra.mxu0 %v540
      %601 = vmatmul.bf16.gmra.mxu0 %v546
      %v602 = vpop.f32.mrf.mxu0
      %v603 = vadd.f32 0.0, %v602
      %v604 = vpop.f32.mrf.mxu0
      %v605 = vadd.f32 0.0, %v604
      %606 = vmatmul.bf16.gmra.mxu0 %v549
      %v607 = vpop.f32.mrf.mxu0
      %v608 = vadd.f32 0.0, %v607
      %v609 = vpop.f32.mrf.mxu0
      %v610 = vadd.f32 0.0, %v609
      %611 = vmatmul.bf16.gmra.mxu0 %v552
      %v612 = vpop.f32.mrf.mxu0
      %v613 = vadd.f32 0.0, %v612
      %v614 = vpop.f32.mrf.mxu0
      %v615 = vadd.f32 0.0, %v614
      %616 = vmatmul.bf16.gmra.mxu0 %v555
      %v617 = vpop.f32.mrf.mxu0
      %v618 = vadd.f32 0.0, %v617
      %v619 = vpop.f32.mrf.mxu0
      %v620 = vadd.f32 0.0, %v619
      %621 = vmatmul.bf16.gmra.mxu0 %v558
      %v622 = vpop.f32.mrf.mxu0
      %v623 = vadd.f32 0.0, %v622
      %v624 = vpop.f32.mrf.mxu0
      %v625 = vadd.f32 0.0, %v624
      %626 = vmatmul.bf16.gmra.mxu0 %v561
      %v627 = vpop.f32.mrf.mxu0
      %v628 = vadd.f32 0.0, %v627
      %v629 = vpop.f32.mrf.mxu0
      %v630 = vadd.f32 0.0, %v629
      %631 = vmatmul.bf16.gmra.mxu0 %v564
      %v632 = vpop.f32.mrf.mxu0
      %v633 = vadd.f32 0.0, %v632
      %v634 = vpop.f32.mrf.mxu0
      %v635 = vadd.f32 0.0, %v634
      %636 = vmatmul.bf16.gmra.mxu0 %v567
      %v637 = vpop.f32.mrf.mxu0
      %v638 = vadd.f32 0.0, %v637
      %v639 = vpop.f32.mrf.mxu0
      %v640 = vadd.f32 0.0, %v639
      %641 = vmatmul.bf16.gmra.mxu0 %v570
      %v642 = vpop.f32.mrf.mxu0
      %v643 = vadd.f32 0.0, %v642
      %v644 = vpop.f32.mrf.mxu0
      %v645 = vadd.f32 0.0, %v644
      %646 = vmatmul.bf16.gmra.mxu0 %v573
      %v647 = vpop.f32.mrf.mxu0
      %v648 = vadd.f32 0.0, %v647
      %v649 = vpop.f32.mrf.mxu0
      %v650 = vadd.f32 0.0, %v649
      %651 = vmatmul.bf16.gmra.mxu0 %v576
      %v652 = vpop.f32.mrf.mxu0
      %v653 = vadd.f32 0.0, %v652
      %v654 = vpop.f32.mrf.mxu0
      %v655 = vadd.f32 0.0, %v654
      %656 = vmatmul.bf16.gmra.mxu0 %v579
      %v657 = vpop.f32.mrf.mxu0
      %v658 = vadd.f32 0.0, %v657
      %v659 = vpop.f32.mrf.mxu0
      %v660 = vadd.f32 0.0, %v659
      %661 = vmatmul.bf16.gmra.mxu0 %v582
      %v662 = vpop.f32.mrf.mxu0
      %v663 = vadd.f32 0.0, %v662
      %v664 = vpop.f32.mrf.mxu0
      %v665 = vadd.f32 0.0, %v664
      %666 = vmatmul.bf16.gmra.mxu0 %v585
      %v667 = vpop.f32.mrf.mxu0
      %v668 = vadd.f32 0.0, %v667
      %v669 = vpop.f32.mrf.mxu0
      %v670 = vadd.f32 0.0, %v669
      %671 = vmatmul.bf16.gmra.mxu0 %v588
      %v672 = vpop.f32.mrf.mxu0
      %v673 = vadd.f32 0.0, %v672
      %v674 = vpop.f32.mrf.mxu0
      %v675 = vadd.f32 0.0, %v674
      %676 = vmatmul.bf16.gmra.mxu0 %v591
      %v677 = vpop.f32.mrf.mxu0
      %v678 = vadd.f32 0.0, %v677
      %v679 = vpop.f32.mrf.mxu0
      %v680 = vadd.f32 0.0, %v679
      %681 = vdwg.mxu0
      %v682 = vpack.c.bf16 %v603, %v603
      %v683 = vpack.c.bf16 %v605, %v605
      %v684 = vpack.c.bf16 %v608, %v608
      %v685 = vpack.c.bf16 %v610, %v610
      %v686 = vpack.c.bf16 %v613, %v613
      %v687 = vpack.c.bf16 %v615, %v615
      %v688 = vpack.c.bf16 %v618, %v618
      %v689 = vpack.c.bf16 %v620, %v620
      %v690 = vpack.c.bf16 %v623, %v623
      %v691 = vpack.c.bf16 %v625, %v625
      %v692 = vpack.c.bf16 %v628, %v628
      %v693 = vpack.c.bf16 %v630, %v630
      %v694 = vpack.c.bf16 %v633, %v633
      %v695 = vpack.c.bf16 %v635, %v635
      %v696 = vpack.c.bf16 %v638, %v638
      %v697 = vpack.c.bf16 %v640, %v640
      %v698 = vpack.c.bf16 %v643, %v643
      %v699 = vpack.c.bf16 %v645, %v645
      %v700 = vpack.c.bf16 %v648, %v648
      %v701 = vpack.c.bf16 %v650, %v650
      %v702 = vpack.c.bf16 %v653, %v653
      %v703 = vpack.c.bf16 %v655, %v655
      %v704 = vpack.c.bf16 %v658, %v658
      %v705 = vpack.c.bf16 %v660, %v660
      %v706 = vpack.c.bf16 %v663, %v663
      %v707 = vpack.c.bf16 %v665, %v665
      %v708 = vpack.c.bf16 %v668, %v668
      %v709 = vpack.c.bf16 %v670, %v670
      %v710 = vpack.c.bf16 %v673, %v673
      %v711 = vpack.c.bf16 %v675, %v675
      %v712 = vpack.c.bf16 %v678, %v678
      %v713 = vpack.c.bf16 %v680, %v680
      %vm714 = vcmask 257024
      %715 = vst.msk [vmem:[%s383] sm:$0xf] %vm714, %v682
      %716 = vst.msk [vmem:[%s383 + $0x4] sm:$0xf] %vm714, %v683
      %717 = vst.msk [vmem:[%s383 + $0x8] sm:$0xf] %vm714, %v684
      %718 = vst.msk [vmem:[%s383 + $0xc] sm:$0xf] %vm714, %v685
      %719 = vst.msk [vmem:[%s383 + $0x10] sm:$0xf] %vm714, %v686
      %720 = vst.msk [vmem:[%s383 + $0x14] sm:$0xf] %vm714, %v687
      %721 = vst.msk [vmem:[%s383 + $0x18] sm:$0xf] %vm714, %v688
      %722 = vst.msk [vmem:[%s383 + $0x1c] sm:$0xf] %vm714, %v689
      %723 = vst.msk [vmem:[%s383 + $0x20] sm:$0xf] %vm714, %v690
      %724 = vst.msk [vmem:[%s383 + $0x24] sm:$0xf] %vm714, %v691
      %725 = vst.msk [vmem:[%s383 + $0x28] sm:$0xf] %vm714, %v692
      %726 = vst.msk [vmem:[%s383 + $0x2c] sm:$0xf] %vm714, %v693
      %727 = vst.msk [vmem:[%s383 + $0x30] sm:$0xf] %vm714, %v694
      %728 = vst.msk [vmem:[%s383 + $0x34] sm:$0xf] %vm714, %v695
      %729 = vst.msk [vmem:[%s383 + $0x38] sm:$0xf] %vm714, %v696
      %730 = vst.msk [vmem:[%s383 + $0x3c] sm:$0xf] %vm714, %v697
      %731 = vst.msk [vmem:[%s383 + $0x40] sm:$0xf] %vm714, %v698
      %732 = vst.msk [vmem:[%s383 + $0x44] sm:$0xf] %vm714, %v699
      %733 = vst.msk [vmem:[%s383 + $0x48] sm:$0xf] %vm714, %v700
      %734 = vst.msk [vmem:[%s383 + $0x4c] sm:$0xf] %vm714, %v701
      %735 = vst.msk [vmem:[%s383 + $0x50] sm:$0xf] %vm714, %v702
      %736 = vst.msk [vmem:[%s383 + $0x54] sm:$0xf] %vm714, %v703
      %737 = vst.msk [vmem:[%s383 + $0x58] sm:$0xf] %vm714, %v704
      %738 = vst.msk [vmem:[%s383 + $0x5c] sm:$0xf] %vm714, %v705
      %739 = vst.msk [vmem:[%s383 + $0x60] sm:$0xf] %vm714, %v706
      %740 = vst.msk [vmem:[%s383 + $0x64] sm:$0xf] %vm714, %v707
      %741 = vst.msk [vmem:[%s383 + $0x68] sm:$0xf] %vm714, %v708
      %742 = vst.msk [vmem:[%s383 + $0x6c] sm:$0xf] %vm714, %v709
      %743 = vst.msk [vmem:[%s383 + $0x70] sm:$0xf] %vm714, %v710
      %744 = vst.msk [vmem:[%s383 + $0x74] sm:$0xf] %vm714, %v711
      %745 = vst.msk [vmem:[%s383 + $0x78] sm:$0xf] %vm714, %v712
      %746 = vst.msk [vmem:[%s383 + $0x7c] sm:$0xf] %vm714, %v713
      %v747 = vld [vmem:[%s2] sm:$0xf]
      %v748 = vld [vmem:[%s2 + $0x4] sm:$0xf]
      %v749 = vld [vmem:[%s2 + $0x8] sm:$0xf]
      %v750 = vld [vmem:[%s2 + $0xc] sm:$0xf]
      %v755 = vunpack.c.l.b16 %v747
      %v756 = vunpack.c.l.b16 %v748
      %v757 = vunpack.c.l.b16 %v749
      %v758 = vunpack.c.l.b16 %v750
      %v759 = vpack.c.b16 %v756, %v755
      %v760 = vpack.c.b16 %v758, %v757
      %763 = vmatpush.bf16.msra.mxu0 0
      %764 = vmatpush.bf16.msra.mxu0 0
      %765 = vmatpush.bf16.msra.mxu0 0
      %766 = vmatpush.bf16.msra.mxu0 0
      %767 = vmatpush.bf16.msra.mxu0 0
      %768 = vmatpush.bf16.msra.mxu0 0
      %769 = vmatpush.bf16.msra.mxu0 %v760
      %770 = vmatpush.bf16.msra.mxu0 %v759
      %771 = vmatmul.bf16.gmra.mxu0 %v546
      %v772 = vpop.f32.mrf.mxu0
      %v773 = vadd.f32 0.0, %v772
      %v774 = vpop.f32.mrf.mxu0
      %v775 = vadd.f32 0.0, %v774
      %776 = vmatmul.bf16.gmra.mxu0 %v549
      %v777 = vpop.f32.mrf.mxu0
      %v778 = vadd.f32 0.0, %v777
      %v779 = vpop.f32.mrf.mxu0
      %v780 = vadd.f32 0.0, %v779
      %781 = vmatmul.bf16.gmra.mxu0 %v552
      %v782 = vpop.f32.mrf.mxu0
      %v783 = vadd.f32 0.0, %v782
      %v784 = vpop.f32.mrf.mxu0
      %v785 = vadd.f32 0.0, %v784
      %786 = vmatmul.bf16.gmra.mxu0 %v555
      %v787 = vpop.f32.mrf.mxu0
      %v788 = vadd.f32 0.0, %v787
      %v789 = vpop.f32.mrf.mxu0
      %v790 = vadd.f32 0.0, %v789
      %791 = vmatmul.bf16.gmra.mxu0 %v558
      %v792 = vpop.f32.mrf.mxu0
      %v793 = vadd.f32 0.0, %v792
      %v794 = vpop.f32.mrf.mxu0
      %v795 = vadd.f32 0.0, %v794
      %796 = vmatmul.bf16.gmra.mxu0 %v561
      %v797 = vpop.f32.mrf.mxu0
      %v798 = vadd.f32 0.0, %v797
      %v799 = vpop.f32.mrf.mxu0
      %v800 = vadd.f32 0.0, %v799
      %801 = vmatmul.bf16.gmra.mxu0 %v564
      %v802 = vpop.f32.mrf.mxu0
      %v803 = vadd.f32 0.0, %v802
      %v804 = vpop.f32.mrf.mxu0
      %v805 = vadd.f32 0.0, %v804
      %806 = vmatmul.bf16.gmra.mxu0 %v567
      %v807 = vpop.f32.mrf.mxu0
      %v808 = vadd.f32 0.0, %v807
      %v809 = vpop.f32.mrf.mxu0
      %v810 = vadd.f32 0.0, %v809
      %811 = vmatmul.bf16.gmra.mxu0 %v570
      %v812 = vpop.f32.mrf.mxu0
      %v813 = vadd.f32 0.0, %v812
      %v814 = vpop.f32.mrf.mxu0
      %v815 = vadd.f32 0.0, %v814
      %816 = vmatmul.bf16.gmra.mxu0 %v573
      %v817 = vpop.f32.mrf.mxu0
      %v818 = vadd.f32 0.0, %v817
      %v819 = vpop.f32.mrf.mxu0
      %v820 = vadd.f32 0.0, %v819
      %821 = vmatmul.bf16.gmra.mxu0 %v576
      %v822 = vpop.f32.mrf.mxu0
      %v823 = vadd.f32 0.0, %v822
      %v824 = vpop.f32.mrf.mxu0
      %v825 = vadd.f32 0.0, %v824
      %826 = vmatmul.bf16.gmra.mxu0 %v579
      %v827 = vpop.f32.mrf.mxu0
      %v828 = vadd.f32 0.0, %v827
      %v829 = vpop.f32.mrf.mxu0
      %v830 = vadd.f32 0.0, %v829
      %831 = vmatmul.bf16.gmra.mxu0 %v582
      %v832 = vpop.f32.mrf.mxu0
      %v833 = vadd.f32 0.0, %v832
      %v834 = vpop.f32.mrf.mxu0
      %v835 = vadd.f32 0.0, %v834
      %836 = vmatmul.bf16.gmra.mxu0 %v585
      %v837 = vpop.f32.mrf.mxu0
      %v838 = vadd.f32 0.0, %v837
      %v839 = vpop.f32.mrf.mxu0
      %v840 = vadd.f32 0.0, %v839
      %841 = vmatmul.bf16.gmra.mxu0 %v588
      %v842 = vpop.f32.mrf.mxu0
      %v843 = vadd.f32 0.0, %v842
      %v844 = vpop.f32.mrf.mxu0
      %v845 = vadd.f32 0.0, %v844
      %846 = vmatmul.bf16.gmra.mxu0 %v591
      %v847 = vpop.f32.mrf.mxu0
      %v848 = vadd.f32 0.0, %v847
      %v849 = vpop.f32.mrf.mxu0
      %v850 = vadd.f32 0.0, %v849
      %851 = vdwg.mxu0
      %v852 = vpack.c.bf16 %v773, %v773
      %v853 = vpack.c.bf16 %v775, %v775
      %v854 = vpack.c.bf16 %v778, %v778
      %v855 = vpack.c.bf16 %v780, %v780
      %v856 = vpack.c.bf16 %v783, %v783
      %v857 = vpack.c.bf16 %v785, %v785
      %v858 = vpack.c.bf16 %v788, %v788
      %v859 = vpack.c.bf16 %v790, %v790
      %v860 = vpack.c.bf16 %v793, %v793
      %v861 = vpack.c.bf16 %v795, %v795
      %v862 = vpack.c.bf16 %v798, %v798
      %v863 = vpack.c.bf16 %v800, %v800
      %v864 = vpack.c.bf16 %v803, %v803
      %v865 = vpack.c.bf16 %v805, %v805
      %v866 = vpack.c.bf16 %v808, %v808
      %v867 = vpack.c.bf16 %v810, %v810
      %v868 = vpack.c.bf16 %v813, %v813
      %v869 = vpack.c.bf16 %v815, %v815
      %v870 = vpack.c.bf16 %v818, %v818
      %v871 = vpack.c.bf16 %v820, %v820
      %v872 = vpack.c.bf16 %v823, %v823
      %v873 = vpack.c.bf16 %v825, %v825
      %v874 = vpack.c.bf16 %v828, %v828
      %v875 = vpack.c.bf16 %v830, %v830
      %v876 = vpack.c.bf16 %v833, %v833
      %v877 = vpack.c.bf16 %v835, %v835
      %v878 = vpack.c.bf16 %v838, %v838
      %v879 = vpack.c.bf16 %v840, %v840
      %v880 = vpack.c.bf16 %v843, %v843
      %v881 = vpack.c.bf16 %v845, %v845
      %v882 = vpack.c.bf16 %v848, %v848
      %v883 = vpack.c.bf16 %v850, %v850
      %884 = vst.msk [vmem:[%s393] sm:$0xf] %vm714, %v852
      %885 = vst.msk [vmem:[%s393 + $0x4] sm:$0xf] %vm714, %v853
      %886 = vst.msk [vmem:[%s393 + $0x8] sm:$0xf] %vm714, %v854
      %887 = vst.msk [vmem:[%s393 + $0xc] sm:$0xf] %vm714, %v855
      %888 = vst.msk [vmem:[%s393 + $0x10] sm:$0xf] %vm714, %v856
      %889 = vst.msk [vmem:[%s393 + $0x14] sm:$0xf] %vm714, %v857
      %890 = vst.msk [vmem:[%s393 + $0x18] sm:$0xf] %vm714, %v858
      %891 = vst.msk [vmem:[%s393 + $0x1c] sm:$0xf] %vm714, %v859
      %892 = vst.msk [vmem:[%s393 + $0x20] sm:$0xf] %vm714, %v860
      %893 = vst.msk [vmem:[%s393 + $0x24] sm:$0xf] %vm714, %v861
      %894 = vst.msk [vmem:[%s393 + $0x28] sm:$0xf] %vm714, %v862
      %895 = vst.msk [vmem:[%s393 + $0x2c] sm:$0xf] %vm714, %v863
      %896 = vst.msk [vmem:[%s393 + $0x30] sm:$0xf] %vm714, %v864
      %897 = vst.msk [vmem:[%s393 + $0x34] sm:$0xf] %vm714, %v865
      %898 = vst.msk [vmem:[%s393 + $0x38] sm:$0xf] %vm714, %v866
      %899 = vst.msk [vmem:[%s393 + $0x3c] sm:$0xf] %vm714, %v867
      %900 = vst.msk [vmem:[%s393 + $0x40] sm:$0xf] %vm714, %v868
      %901 = vst.msk [vmem:[%s393 + $0x44] sm:$0xf] %vm714, %v869
      %902 = vst.msk [vmem:[%s393 + $0x48] sm:$0xf] %vm714, %v870
      %903 = vst.msk [vmem:[%s393 + $0x4c] sm:$0xf] %vm714, %v871
      %904 = vst.msk [vmem:[%s393 + $0x50] sm:$0xf] %vm714, %v872
      %905 = vst.msk [vmem:[%s393 + $0x54] sm:$0xf] %vm714, %v873
      %906 = vst.msk [vmem:[%s393 + $0x58] sm:$0xf] %vm714, %v874
      %907 = vst.msk [vmem:[%s393 + $0x5c] sm:$0xf] %vm714, %v875
      %908 = vst.msk [vmem:[%s393 + $0x60] sm:$0xf] %vm714, %v876
      %909 = vst.msk [vmem:[%s393 + $0x64] sm:$0xf] %vm714, %v877
      %910 = vst.msk [vmem:[%s393 + $0x68] sm:$0xf] %vm714, %v878
      %911 = vst.msk [vmem:[%s393 + $0x6c] sm:$0xf] %vm714, %v879
      %912 = vst.msk [vmem:[%s393 + $0x70] sm:$0xf] %vm714, %v880
      %913 = vst.msk [vmem:[%s393 + $0x74] sm:$0xf] %vm714, %v881
      %914 = vst.msk [vmem:[%s393 + $0x78] sm:$0xf] %vm714, %v882
      %915 = vst.msk [vmem:[%s393 + $0x7c] sm:$0xf] %vm714, %v883
      %v916 = vld [vmem:[%s3] sm:$0xf]
      %v917 = vld [vmem:[%s3 + $0x4] sm:$0xf]
      %v918 = vld [vmem:[%s3 + $0x8] sm:$0xf]
      %v919 = vld [vmem:[%s3 + $0xc] sm:$0xf]
      %v924 = vunpack.c.l.b16 %v916
      %v925 = vunpack.c.l.b16 %v917
      %v926 = vunpack.c.l.b16 %v918
      %v927 = vunpack.c.l.b16 %v919
      %v928 = vpack.c.b16 %v925, %v924
      %v929 = vpack.c.b16 %v927, %v926
      %932 = vmatpush.bf16.msra.mxu0 0
      %933 = vmatpush.bf16.msra.mxu0 0
      %934 = vmatpush.bf16.msra.mxu0 0
      %935 = vmatpush.bf16.msra.mxu0 0
      %936 = vmatpush.bf16.msra.mxu0 0
      %937 = vmatpush.bf16.msra.mxu0 0
      %938 = vmatpush.bf16.msra.mxu0 %v929
      %939 = vmatpush.bf16.msra.mxu0 %v928
      %940 = vmatmul.bf16.gmra.mxu0 %v546
      %v941 = vpop.f32.mrf.mxu0
      %v942 = vadd.f32 0.0, %v941
      %v943 = vpop.f32.mrf.mxu0
      %v944 = vadd.f32 0.0, %v943
      %945 = vmatmul.bf16.gmra.mxu0 %v549
      %v946 = vpop.f32.mrf.mxu0
      %v947 = vadd.f32 0.0, %v946
      %v948 = vpop.f32.mrf.mxu0
      %v949 = vadd.f32 0.0, %v948
      %950 = vmatmul.bf16.gmra.mxu0 %v552
      %v951 = vpop.f32.mrf.mxu0
      %v952 = vadd.f32 0.0, %v951
      %v953 = vpop.f32.mrf.mxu0
      %v954 = vadd.f32 0.0, %v953
      %955 = vmatmul.bf16.gmra.mxu0 %v555
      %v956 = vpop.f32.mrf.mxu0
      %v957 = vadd.f32 0.0, %v956
      %v958 = vpop.f32.mrf.mxu0
      %v959 = vadd.f32 0.0, %v958
      %960 = vmatmul.bf16.gmra.mxu0 %v558
      %v961 = vpop.f32.mrf.mxu0
      %v962 = vadd.f32 0.0, %v961
      %v963 = vpop.f32.mrf.mxu0
      %v964 = vadd.f32 0.0, %v963
      %965 = vmatmul.bf16.gmra.mxu0 %v561
      %v966 = vpop.f32.mrf.mxu0
      %v967 = vadd.f32 0.0, %v966
      %v968 = vpop.f32.mrf.mxu0
      %v969 = vadd.f32 0.0, %v968
      %970 = vmatmul.bf16.gmra.mxu0 %v564
      %v971 = vpop.f32.mrf.mxu0
      %v972 = vadd.f32 0.0, %v971
      %v973 = vpop.f32.mrf.mxu0
      %v974 = vadd.f32 0.0, %v973
      %975 = vmatmul.bf16.gmra.mxu0 %v567
      %v976 = vpop.f32.mrf.mxu0
      %v977 = vadd.f32 0.0, %v976
      %v978 = vpop.f32.mrf.mxu0
      %v979 = vadd.f32 0.0, %v978
      %980 = vmatmul.bf16.gmra.mxu0 %v570
      %v981 = vpop.f32.mrf.mxu0
      %v982 = vadd.f32 0.0, %v981
      %v983 = vpop.f32.mrf.mxu0
      %v984 = vadd.f32 0.0, %v983
      %985 = vmatmul.bf16.gmra.mxu0 %v573
      %v986 = vpop.f32.mrf.mxu0
      %v987 = vadd.f32 0.0, %v986
      %v988 = vpop.f32.mrf.mxu0
      %v989 = vadd.f32 0.0, %v988
      %990 = vmatmul.bf16.gmra.mxu0 %v576
      %v991 = vpop.f32.mrf.mxu0
      %v992 = vadd.f32 0.0, %v991
      %v993 = vpop.f32.mrf.mxu0
      %v994 = vadd.f32 0.0, %v993
      %995 = vmatmul.bf16.gmra.mxu0 %v579
      %v996 = vpop.f32.mrf.mxu0
      %v997 = vadd.f32 0.0, %v996
      %v998 = vpop.f32.mrf.mxu0
      %v999 = vadd.f32 0.0, %v998
      %1000 = vmatmul.bf16.gmra.mxu0 %v582
      %v1001 = vpop.f32.mrf.mxu0
      %v1002 = vadd.f32 0.0, %v1001
      %v1003 = vpop.f32.mrf.mxu0
      %v1004 = vadd.f32 0.0, %v1003
      %1005 = vmatmul.bf16.gmra.mxu0 %v585
      %v1006 = vpop.f32.mrf.mxu0
      %v1007 = vadd.f32 0.0, %v1006
      %v1008 = vpop.f32.mrf.mxu0
      %v1009 = vadd.f32 0.0, %v1008
      %1010 = vmatmul.bf16.gmra.mxu0 %v588
      %v1011 = vpop.f32.mrf.mxu0
      %v1012 = vadd.f32 0.0, %v1011
      %v1013 = vpop.f32.mrf.mxu0
      %v1014 = vadd.f32 0.0, %v1013
      %1015 = vmatmul.bf16.gmra.mxu0 %v591
      %v1016 = vpop.f32.mrf.mxu0
      %v1017 = vadd.f32 0.0, %v1016
      %v1018 = vpop.f32.mrf.mxu0
      %v1019 = vadd.f32 0.0, %v1018
      %1020 = vdwg.mxu0
      %v1021 = vpack.c.bf16 %v942, %v942
      %v1022 = vpack.c.bf16 %v944, %v944
      %v1023 = vpack.c.bf16 %v947, %v947
      %v1024 = vpack.c.bf16 %v949, %v949
      %v1025 = vpack.c.bf16 %v952, %v952
      %v1026 = vpack.c.bf16 %v954, %v954
      %v1027 = vpack.c.bf16 %v957, %v957
      %v1028 = vpack.c.bf16 %v959, %v959
      %v1029 = vpack.c.bf16 %v962, %v962
      %v1030 = vpack.c.bf16 %v964, %v964
      %v1031 = vpack.c.bf16 %v967, %v967
      %v1032 = vpack.c.bf16 %v969, %v969
      %v1033 = vpack.c.bf16 %v972, %v972
      %v1034 = vpack.c.bf16 %v974, %v974
      %v1035 = vpack.c.bf16 %v977, %v977
      %v1036 = vpack.c.bf16 %v979, %v979
      %v1037 = vpack.c.bf16 %v982, %v982
      %v1038 = vpack.c.bf16 %v984, %v984
      %v1039 = vpack.c.bf16 %v987, %v987
      %v1040 = vpack.c.bf16 %v989, %v989
      %v1041 = vpack.c.bf16 %v992, %v992
      %v1042 = vpack.c.bf16 %v994, %v994
      %v1043 = vpack.c.bf16 %v997, %v997
      %v1044 = vpack.c.bf16 %v999, %v999
      %v1045 = vpack.c.bf16 %v1002, %v1002
      %v1046 = vpack.c.bf16 %v1004, %v1004
      %v1047 = vpack.c.bf16 %v1007, %v1007
      %v1048 = vpack.c.bf16 %v1009, %v1009
      %v1049 = vpack.c.bf16 %v1012, %v1012
      %v1050 = vpack.c.bf16 %v1014, %v1014
      %v1051 = vpack.c.bf16 %v1017, %v1017
      %v1052 = vpack.c.bf16 %v1019, %v1019
      %1053 = vst.msk [vmem:[%s403] sm:$0xf] %vm714, %v1021
      %1054 = vst.msk [vmem:[%s403 + $0x4] sm:$0xf] %vm714, %v1022
      %1055 = vst.msk [vmem:[%s403 + $0x8] sm:$0xf] %vm714, %v1023
      %1056 = vst.msk [vmem:[%s403 + $0xc] sm:$0xf] %vm714, %v1024
      %1057 = vst.msk [vmem:[%s403 + $0x10] sm:$0xf] %vm714, %v1025
      %1058 = vst.msk [vmem:[%s403 + $0x14] sm:$0xf] %vm714, %v1026
      %1059 = vst.msk [vmem:[%s403 + $0x18] sm:$0xf] %vm714, %v1027
      %1060 = vst.msk [vmem:[%s403 + $0x1c] sm:$0xf] %vm714, %v1028
      %1061 = vst.msk [vmem:[%s403 + $0x20] sm:$0xf] %vm714, %v1029
      %1062 = vst.msk [vmem:[%s403 + $0x24] sm:$0xf] %vm714, %v1030
      %1063 = vst.msk [vmem:[%s403 + $0x28] sm:$0xf] %vm714, %v1031
      %1064 = vst.msk [vmem:[%s403 + $0x2c] sm:$0xf] %vm714, %v1032
      %1065 = vst.msk [vmem:[%s403 + $0x30] sm:$0xf] %vm714, %v1033
      %1066 = vst.msk [vmem:[%s403 + $0x34] sm:$0xf] %vm714, %v1034
      %1067 = vst.msk [vmem:[%s403 + $0x38] sm:$0xf] %vm714, %v1035
      %1068 = vst.msk [vmem:[%s403 + $0x3c] sm:$0xf] %vm714, %v1036
      %1069 = vst.msk [vmem:[%s403 + $0x40] sm:$0xf] %vm714, %v1037
      %1070 = vst.msk [vmem:[%s403 + $0x44] sm:$0xf] %vm714, %v1038
      %1071 = vst.msk [vmem:[%s403 + $0x48] sm:$0xf] %vm714, %v1039
      %1072 = vst.msk [vmem:[%s403 + $0x4c] sm:$0xf] %vm714, %v1040
      %1073 = vst.msk [vmem:[%s403 + $0x50] sm:$0xf] %vm714, %v1041
      %1074 = vst.msk [vmem:[%s403 + $0x54] sm:$0xf] %vm714, %v1042
      %1075 = vst.msk [vmem:[%s403 + $0x58] sm:$0xf] %vm714, %v1043
      %1076 = vst.msk [vmem:[%s403 + $0x5c] sm:$0xf] %vm714, %v1044
      %1077 = vst.msk [vmem:[%s403 + $0x60] sm:$0xf] %vm714, %v1045
      %1078 = vst.msk [vmem:[%s403 + $0x64] sm:$0xf] %vm714, %v1046
      %1079 = vst.msk [vmem:[%s403 + $0x68] sm:$0xf] %vm714, %v1047
      %1080 = vst.msk [vmem:[%s403 + $0x6c] sm:$0xf] %vm714, %v1048
      %1081 = vst.msk [vmem:[%s403 + $0x70] sm:$0xf] %vm714, %v1049
      %1082 = vst.msk [vmem:[%s403 + $0x74] sm:$0xf] %vm714, %v1050
      %1083 = vst.msk [vmem:[%s403 + $0x78] sm:$0xf] %vm714, %v1051
      %1084 = vst.msk [vmem:[%s403 + $0x7c] sm:$0xf] %vm714, %v1052
      %v1085 = vld [vmem:[%s4] sm:$0xf]
      %v1086 = vld [vmem:[%s4 + $0x4] sm:$0xf]
      %v1087 = vld [vmem:[%s4 + $0x8] sm:$0xf]
      %v1088 = vld [vmem:[%s4 + $0xc] sm:$0xf]
      %v1093 = vunpack.c.l.b16 %v1085
      %v1094 = vunpack.c.l.b16 %v1086
      %v1095 = vunpack.c.l.b16 %v1087
      %v1096 = vunpack.c.l.b16 %v1088
      %v1097 = vpack.c.b16 %v1094, %v1093
      %v1098 = vpack.c.b16 %v1096, %v1095
      %1101 = vmatpush.bf16.msra.mxu0 0
      %1102 = vmatpush.bf16.msra.mxu0 0
      %1103 = vmatpush.bf16.msra.mxu0 0
      %1104 = vmatpush.bf16.msra.mxu0 0
      %1105 = vmatpush.bf16.msra.mxu0 0
      %1106 = vmatpush.bf16.msra.mxu0 0
      %1107 = vmatpush.bf16.msra.mxu0 %v1098
      %1108 = vmatpush.bf16.msra.mxu0 %v1097
      %1109 = vmatmul.bf16.gmra.mxu0 %v546
      %v1110 = vpop.f32.mrf.mxu0
      %v1111 = vadd.f32 0.0, %v1110
      %v1112 = vpop.f32.mrf.mxu0
      %v1113 = vadd.f32 0.0, %v1112
      %1114 = vmatmul.bf16.gmra.mxu0 %v549
      %v1115 = vpop.f32.mrf.mxu0
      %v1116 = vadd.f32 0.0, %v1115
      %v1117 = vpop.f32.mrf.mxu0
      %v1118 = vadd.f32 0.0, %v1117
      %1119 = vmatmul.bf16.gmra.mxu0 %v552
      %v1120 = vpop.f32.mrf.mxu0
      %v1121 = vadd.f32 0.0, %v1120
      %v1122 = vpop.f32.mrf.mxu0
      %v1123 = vadd.f32 0.0, %v1122
      %1124 = vmatmul.bf16.gmra.mxu0 %v555
      %v1125 = vpop.f32.mrf.mxu0
      %v1126 = vadd.f32 0.0, %v1125
      %v1127 = vpop.f32.mrf.mxu0
      %v1128 = vadd.f32 0.0, %v1127
      %1129 = vmatmul.bf16.gmra.mxu0 %v558
      %v1130 = vpop.f32.mrf.mxu0
      %v1131 = vadd.f32 0.0, %v1130
      %v1132 = vpop.f32.mrf.mxu0
      %v1133 = vadd.f32 0.0, %v1132
      %1134 = vmatmul.bf16.gmra.mxu0 %v561
      %v1135 = vpop.f32.mrf.mxu0
      %v1136 = vadd.f32 0.0, %v1135
      %v1137 = vpop.f32.mrf.mxu0
      %v1138 = vadd.f32 0.0, %v1137
      %1139 = vmatmul.bf16.gmra.mxu0 %v564
      %v1140 = vpop.f32.mrf.mxu0
      %v1141 = vadd.f32 0.0, %v1140
      %v1142 = vpop.f32.mrf.mxu0
      %v1143 = vadd.f32 0.0, %v1142
      %1144 = vmatmul.bf16.gmra.mxu0 %v567
      %v1145 = vpop.f32.mrf.mxu0
      %v1146 = vadd.f32 0.0, %v1145
      %v1147 = vpop.f32.mrf.mxu0
      %v1148 = vadd.f32 0.0, %v1147
      %1149 = vmatmul.bf16.gmra.mxu0 %v570
      %v1150 = vpop.f32.mrf.mxu0
      %v1151 = vadd.f32 0.0, %v1150
      %v1152 = vpop.f32.mrf.mxu0
      %v1153 = vadd.f32 0.0, %v1152
      %1154 = vmatmul.bf16.gmra.mxu0 %v573
      %v1155 = vpop.f32.mrf.mxu0
      %v1156 = vadd.f32 0.0, %v1155
      %v1157 = vpop.f32.mrf.mxu0
      %v1158 = vadd.f32 0.0, %v1157
      %1159 = vmatmul.bf16.gmra.mxu0 %v576
      %v1160 = vpop.f32.mrf.mxu0
      %v1161 = vadd.f32 0.0, %v1160
      %v1162 = vpop.f32.mrf.mxu0
      %v1163 = vadd.f32 0.0, %v1162
      %1164 = vmatmul.bf16.gmra.mxu0 %v579
      %v1165 = vpop.f32.mrf.mxu0
      %v1166 = vadd.f32 0.0, %v1165
      %v1167 = vpop.f32.mrf.mxu0
      %v1168 = vadd.f32 0.0, %v1167
      %1169 = vmatmul.bf16.gmra.mxu0 %v582
      %v1170 = vpop.f32.mrf.mxu0
      %v1171 = vadd.f32 0.0, %v1170
      %v1172 = vpop.f32.mrf.mxu0
      %v1173 = vadd.f32 0.0, %v1172
      %1174 = vmatmul.bf16.gmra.mxu0 %v585
      %v1175 = vpop.f32.mrf.mxu0
      %v1176 = vadd.f32 0.0, %v1175
      %v1177 = vpop.f32.mrf.mxu0
      %v1178 = vadd.f32 0.0, %v1177
      %1179 = vmatmul.bf16.gmra.mxu0 %v588
      %v1180 = vpop.f32.mrf.mxu0
      %v1181 = vadd.f32 0.0, %v1180
      %v1182 = vpop.f32.mrf.mxu0
      %v1183 = vadd.f32 0.0, %v1182
      %1184 = vmatmul.bf16.gmra.mxu0 %v591
      %v1185 = vpop.f32.mrf.mxu0
      %v1186 = vadd.f32 0.0, %v1185
      %v1187 = vpop.f32.mrf.mxu0
      %v1188 = vadd.f32 0.0, %v1187
      %1189 = vdwg.mxu0
      %vm1190 = vcmask 7168
      %1191 = vst.msk [vmem:[%s413] sm:$0xff] %vm1190, %v1111
      %1192 = vst.msk [vmem:[%s413 + $0x8] sm:$0xff] %vm1190, %v1113
      %1193 = vst.msk [vmem:[%s413 + $0x10] sm:$0xff] %vm1190, %v1116
      %1194 = vst.msk [vmem:[%s413 + $0x18] sm:$0xff] %vm1190, %v1118
      %1195 = vst.msk [vmem:[%s413 + $0x20] sm:$0xff] %vm1190, %v1121
      %1196 = vst.msk [vmem:[%s413 + $0x28] sm:$0xff] %vm1190, %v1123
      %1197 = vst.msk [vmem:[%s413 + $0x30] sm:$0xff] %vm1190, %v1126
      %1198 = vst.msk [vmem:[%s413 + $0x38] sm:$0xff] %vm1190, %v1128
      %1199 = vst.msk [vmem:[%s413 + $0x40] sm:$0xff] %vm1190, %v1131
      %1200 = vst.msk [vmem:[%s413 + $0x48] sm:$0xff] %vm1190, %v1133
      %1201 = vst.msk [vmem:[%s413 + $0x50] sm:$0xff] %vm1190, %v1136
      %1202 = vst.msk [vmem:[%s413 + $0x58] sm:$0xff] %vm1190, %v1138
      %1203 = vst.msk [vmem:[%s413 + $0x60] sm:$0xff] %vm1190, %v1141
      %1204 = vst.msk [vmem:[%s413 + $0x68] sm:$0xff] %vm1190, %v1143
      %1205 = vst.msk [vmem:[%s413 + $0x70] sm:$0xff] %vm1190, %v1146
      %1206 = vst.msk [vmem:[%s413 + $0x78] sm:$0xff] %vm1190, %v1148
      %1207 = vst.msk [vmem:[%s413 + $0x80] sm:$0xff] %vm1190, %v1151
      %1208 = vst.msk [vmem:[%s413 + $0x88] sm:$0xff] %vm1190, %v1153
      %1209 = vst.msk [vmem:[%s413 + $0x90] sm:$0xff] %vm1190, %v1156
      %1210 = vst.msk [vmem:[%s413 + $0x98] sm:$0xff] %vm1190, %v1158
      %1211 = vst.msk [vmem:[%s413 + $0xa0] sm:$0xff] %vm1190, %v1161
      %1212 = vst.msk [vmem:[%s413 + $0xa8] sm:$0xff] %vm1190, %v1163
      %1213 = vst.msk [vmem:[%s413 + $0xb0] sm:$0xff] %vm1190, %v1166
      %1214 = vst.msk [vmem:[%s413 + $0xb8] sm:$0xff] %vm1190, %v1168
      %1215 = vst.msk [vmem:[%s413 + $0xc0] sm:$0xff] %vm1190, %v1171
      %1216 = vst.msk [vmem:[%s413 + $0xc8] sm:$0xff] %vm1190, %v1173
      %1217 = vst.msk [vmem:[%s413 + $0xd0] sm:$0xff] %vm1190, %v1176
      %1218 = vst.msk [vmem:[%s413 + $0xd8] sm:$0xff] %vm1190, %v1178
      %1219 = vst.msk [vmem:[%s413 + $0xe0] sm:$0xff] %vm1190, %v1181
      %1220 = vst.msk [vmem:[%s413 + $0xe8] sm:$0xff] %vm1190, %v1183
      %1221 = vst.msk [vmem:[%s413 + $0xf0] sm:$0xff] %vm1190, %v1186
      %1222 = vst.msk [vmem:[%s413 + $0xf8] sm:$0xff] %vm1190, %v1188
      %s1223 = smul.u32 32, %s25
      %p1224 = scmp.lt.s32.totalorder %s24, 1
      %s1225 = scalar_select %p1224, %s24, 1
      %p1226 = scmp.lt.s32.totalorder %s1223, 31
      %s1227 = scalar_select %p1226, %s1223, 31
      %s1228 = smul.addr %s1225, 32
      %s1229 = sadd.s32 %s1227, %s1228
      %s1230 = smul.addr %s1229, 4
      %s1231 = scalar_lea.vmem %s5, %s1230
      %s1232 = smul.u32 32, %s25
      %p1233 = scmp.lt.s32.totalorder %s24, 1
      %s1234 = scalar_select %p1233, %s24, 1
      %p1235 = scmp.lt.s32.totalorder %s1232, 31
      %s1236 = scalar_select %p1235, %s1232, 31
      %s1237 = smul.addr %s1234, 32
      %s1238 = sadd.s32 %s1236, %s1237
      %s1239 = smul.addr %s1238, 4
      %s1240 = scalar_lea.vmem %s6, %s1239
      %s1241 = smul.u32 32, %s25
      %p1242 = scmp.lt.s32.totalorder %s24, 1
      %s1243 = scalar_select %p1242, %s24, 1
      %p1244 = scmp.lt.s32.totalorder %s1241, 31
      %s1245 = scalar_select %p1244, %s1241, 31
      %s1246 = smul.addr %s1243, 32
      %s1247 = sadd.s32 %s1245, %s1246
      %s1248 = smul.addr %s1247, 4
      %s1249 = scalar_lea.vmem %s7, %s1248
      %s1250 = smul.u32 32, %s25
      %p1251 = scmp.lt.s32.totalorder %s24, 1
      %s1252 = scalar_select %p1251, %s24, 1
      %p1253 = scmp.lt.s32.totalorder %s1250, 31
      %s1254 = scalar_select %p1253, %s1250, 31
      %s1255 = smul.addr %s1252, 32
      %s1256 = sadd.s32 %s1254, %s1255
      %s1257 = smul.addr %s1256, 8
      %s1258 = scalar_lea.vmem %s8, %s1257
      // Predicated region
      $region41: #{tpu_custom_call.1} parent=39 // pred_check
        %p1259 = pneg %p164
      $region42: #{tpu_custom_call.1} parent=39 // pred_check_branch
        %1261 = sbr.rel (%p1259) target = $region44
      $region43: #{tpu_custom_call.1} parent=39 // pred_region
        %s1262 = smul.u32 32, %s25
      $region44: #{tpu_custom_call.1} parent=39 // pred_fallthru
        _
      // Predicated region
      $region45: #{tpu_custom_call.1} parent=39 // pred_check
        %p1263 = pneg %p192
      $region46: #{tpu_custom_call.1} parent=39 // pred_check_branch
        %1265 = sbr.rel (%p1263) target = $region48
      $region47: #{tpu_custom_call.1} parent=39 // pred_region
        %s1266 = smul.u32 32, %s25
      $region48: #{tpu_custom_call.1} parent=39 // pred_fallthru
        _
      // Predicated region
      $region49: #{tpu_custom_call.1} parent=39 // pred_check
        %p1267 = pneg %p220
      $region50: #{tpu_custom_call.1} parent=39 // pred_check_branch
        %1269 = sbr.rel (%p1267) target = $region52
      $region51: #{tpu_custom_call.1} parent=39 // pred_region
        %s1270 = smul.u32 32, %s25
      $region52: #{tpu_custom_call.1} parent=39 // pred_fallthru
        _
      // Predicated region
      $region53: #{tpu_custom_call.1} parent=39 // pred_check
        %p1271 = pneg %p248
      $region54: #{tpu_custom_call.1} parent=39 // pred_check_branch
        %1273 = sbr.rel (%p1271) target = $region56
      $region55: #{tpu_custom_call.1} parent=39 // pred_region
        %s1274 = smul.u32 32, %s25
      $region56: #{tpu_custom_call.1} parent=39 // pred_fallthru
        _
    $region40: #{tpu_custom_call.1} parent=5 // pred_fallthru
      _
    %p1275 = scmp.le.s32.totalorder 2, %s15
    // Predicated region
    $region57: #{tpu_custom_call.1} parent=5 // pred_check
      %p1276 = pneg %p1275
    $region58: #{tpu_custom_call.1} parent=5 // pred_check_branch
      %1278 = sbr.rel (%p1276) target = $region60
    $region59: #{tpu_custom_call.1} parent=5 // pred_region
      %s1279 = ssub.s32 %s15, 2
      // Predicated region
      $region61: #{tpu_custom_call.1} parent=59 // pred_check
        %p1280 = pneg %p170
      $region62: #{tpu_custom_call.1} parent=59 // pred_check_branch
        %1282 = sbr.rel (%p1280) target = $region64
      $region63: #{tpu_custom_call.1} parent=59 // pred_region
        %s1283 = smul.u32 32, %s27
        %p1284 = scmp.lt.s32.totalorder %s26, 1
        %s1285 = scalar_select %p1284, %s26, 1
        %p1286 = scmp.lt.s32.totalorder %s1283, 31
        %s1287 = scalar_select %p1286, %s1283, 31
        %s1288 = smul.addr %s1285, 32
        %s1289 = sadd.s32 %s1287, %s1288
        %s1290 = smul.addr %s1289, 4
        %s1291 = scalar_lea.vmem %s5, %s1290
      $region64: #{tpu_custom_call.1} parent=59 // pred_fallthru
        _
      // Predicated region
      $region65: #{tpu_custom_call.1} parent=59 // pred_check
        %p1292 = pneg %p198
      $region66: #{tpu_custom_call.1} parent=59 // pred_check_branch
        %1294 = sbr.rel (%p1292) target = $region68
      $region67: #{tpu_custom_call.1} parent=59 // pred_region
        %s1295 = smul.u32 32, %s27
        %p1296 = scmp.lt.s32.totalorder %s26, 1
        %s1297 = scalar_select %p1296, %s26, 1
        %p1298 = scmp.lt.s32.totalorder %s1295, 31
        %s1299 = scalar_select %p1298, %s1295, 31
        %s1300 = smul.addr %s1297, 32
        %s1301 = sadd.s32 %s1299, %s1300
        %s1302 = smul.addr %s1301, 4
        %s1303 = scalar_lea.vmem %s6, %s1302
      $region68: #{tpu_custom_call.1} parent=59 // pred_fallthru
        _
      // Predicated region
      $region69: #{tpu_custom_call.1} parent=59 // pred_check
        %p1304 = pneg %p226
      $region70: #{tpu_custom_call.1} parent=59 // pred_check_branch
        %1306 = sbr.rel (%p1304) target = $region72
      $region71: #{tpu_custom_call.1} parent=59 // pred_region
        %s1307 = smul.u32 32, %s27
        %p1308 = scmp.lt.s32.totalorder %s26, 1
        %s1309 = scalar_select %p1308, %s26, 1
        %p1310 = scmp.lt.s32.totalorder %s1307, 31
        %s1311 = scalar_select %p1310, %s1307, 31
        %s1312 = smul.addr %s1309, 32
        %s1313 = sadd.s32 %s1311, %s1312
        %s1314 = smul.addr %s1313, 4
        %s1315 = scalar_lea.vmem %s7, %s1314
      $region72: #{tpu_custom_call.1} parent=59 // pred_fallthru
        _
      // Predicated region
      $region73: #{tpu_custom_call.1} parent=59 // pred_check
        %p1316 = pneg %p254
      $region74: #{tpu_custom_call.1} parent=59 // pred_check_branch
        %1318 = sbr.rel (%p1316) target = $region76
      $region75: #{tpu_custom_call.1} parent=59 // pred_region
        %s1319 = smul.u32 32, %s27
        %p1320 = scmp.lt.s32.totalorder %s26, 1
        %s1321 = scalar_select %p1320, %s26, 1
        %p1322 = scmp.lt.s32.totalorder %s1319, 31
        %s1323 = scalar_select %p1322, %s1319, 31
        %s1324 = smul.addr %s1321, 32
        %s1325 = sadd.s32 %s1323, %s1324
        %s1326 = smul.addr %s1325, 8
        %s1327 = scalar_lea.vmem %s8, %s1326
      $region76: #{tpu_custom_call.1} parent=59 // pred_fallthru
        _
    $region60: #{tpu_custom_call.1} parent=5 // pred_fallthru
      _
  $region6: #{tpu_custom_call.1} parent=0 // loop_footer
    %s19 = sadd.s32 1, %s15
  $region7: #{tpu_custom_call.1} parent=0 // loop_footer_branch
    %14 = sbr.rel target = $region3
  $region8: #{tpu_custom_call.1} parent=0 // loop_exit
    _

// kernel: tpu_custom_call.1
$region0: #{tpu_custom_call.1}
  #allocation0 [shape = 'u32[]', space=smem, size = 0x4, offset = 0x4, fixed_abs, tag = 'smem constant byte address 0x4 - core index']
  #allocation1 [shape = 'u32[72,128]{1,0:T(1,128)}', space=vmem, size = 0x9000, scoped, tag = 'internal scratch']
  %s0 = inlined_call_operand.vmem [shape: bf16[2,256,32], index: 0, kind: input, shape index: {}]
  %s1 = inlined_call_operand.vmem [shape: bf16[32,32], index: 1, kind: input, shape index: {}]
  %s2 = inlined_call_operand.vmem [shape: bf16[32,32], index: 2, kind: input, shape index: {}]
  %s3 = inlined_call_operand.vmem [shape: bf16[32,32], index: 3, kind: input, shape index: {}]
  %s4 = inlined_call_operand.vmem [shape: bf16[32,1], index: 4, kind: input, shape index: {}]
  %s5 = inlined_call_operand.vmem [shape: bf16[2,256,32], index: 5, kind: output, shape index: {0}]
  %s6 = inlined_call_operand.vmem [shape: bf16[2,256,32], index: 6, kind: output, shape index: {1}]
  %s7 = inlined_call_operand.vmem [shape: bf16[2,256,32], index: 7, kind: output, shape index: {2}]
  %s8 = inlined_call_operand.vmem [shape: f32[2,256,1], index: 8, kind: output, shape index: {3}]
  %9 = xla_tuple %s5, %s6, %s7, %s8
  %s10 = sld [smem:[#allocation0]]
  $region77: #{tpu_custom_call.1} parent=0
    _
  %s12 = ssub.s32 1, %s10
  %s13 = scalar_select 0, %s12, %s10
  loop: start=0, step=1, limit=4
  $region2: #{tpu_custom_call.1} parent=0 // loop_pre_header
    _
  $region3: #{tpu_custom_call.1} parent=0 // loop_header
    %s15 = sphi 0, %s19
    %p16 = scmp.ge.s32.totalorder %s15, 4
    %s22 = sphi 0, %s34
    %s23 = sphi 0, %s30
    %s24 = sphi 0, %s22
    %s25 = sphi 0, %s23
    %s26 = sphi 0, %s24
    %s27 = sphi 0, %s25
    %s39 = sphi 0, %s41
    %s42 = sphi 0, %s39
    %s43 = sphi 0, %s42
    %s59 = sphi 0, %s43
    %s63 = sphi 0, %s63
    %s65 = sphi 0, %s63
    %s66 = sphi 0, %s65
    %s80 = sphi 0, %s66
    %s84 = sphi 0, %s84
    %s86 = sphi 0, %s84
    %s87 = sphi 0, %s86
    %s101 = sphi 0, %s87
    %s105 = sphi 0, %s105
    %s107 = sphi 0, %s105
    %s108 = sphi 0, %s107
    %s122 = sphi 0, %s108
    %s126 = sphi 0, %s126
    %s128 = sphi 0, %s126
    %s129 = sphi 0, %s128
    %s143 = sphi 0, %s129
    %s151 = sphi 0, %s153
    %s154 = sphi 0, %s151
    %s155 = sphi 0, %s154
    %s171 = sphi 0, %s155
    %s179 = sphi 0, %s181
    %s182 = sphi 0, %s179
    %s183 = sphi 0, %s182
    %s199 = sphi 0, %s183
    %s207 = sphi 0, %s209
    %s210 = sphi 0, %s207
    %s211 = sphi 0, %s210
    %s227 = sphi 0, %s211
    %s235 = sphi 0, %s237
    %s238 = sphi 0, %s235
    %s239 = sphi 0, %s238
    %s255 = sphi 0, %s239
  $region4: #{tpu_custom_call.1} parent=0 // loop_header_branch
    %18 = sbr.rel (%p16) target = $region8
  $region5: #{tpu_custom_call.1} parent=0 // loop_body
    %s20 = ssub.s32 %s15, 1
    %s21 = ssub.s32 %s15, 2
    %s28 = sadd.s32 1, %s23
    %p29 = scmp.ge.s32.totalorder %s28, 1
    %s30 = scalar_select %p29, 0, %s28
    %s31 = sadd.s32 1, %s22
    %s32 = scalar_select %p29, %s31, %s22
    %p33 = scmp.ge.s32.totalorder %s32, 2
    %s34 = scalar_select %p33, 0, %s32
    %s35 = ssub.s32 %s22, %s34
    %s36 = ssub.s32 %s23, %s30
    %s37 = sor.u32 %s35, %s36
    %p38 = scmp.eq.s32.totalorder %s37, 0
    %s40 = sadd.s32 %s39, 1
    %s41 = scalar_select %p38, %s39, %s40
    %p44 = pneg %p38
    %p45 = scmp.eq.s32.totalorder %s15, 1
    %p46 = por %p44, %p45
    %p47 = scmp.ne.s32.totalorder %s39, %s42
    %p48 = scmp.eq.s32.totalorder %s15, 0
    %p49 = por %p47, %p48
    %p50 = scmp.ne.s32.totalorder %s39, %s42
    %p51 = scmp.eq.s32.totalorder %s20, 1
    %p52 = por %p50, %p51
    %p53 = scmp.ne.s32.totalorder %s42, %s43
    %p54 = scmp.eq.s32.totalorder %s20, 0
    %p55 = por %p53, %p54
    %p56 = scmp.ne.s32.totalorder %s42, %s43
    %p57 = scmp.eq.s32.totalorder %s21, 1
    %p58 = por %p56, %p57
    %p60 = scmp.ne.s32.totalorder %s43, %s59
    %p61 = scmp.eq.s32.totalorder %s21, 0
    %p62 = por %p60, %p61
    %s64 = sadd.s32 %s63, 1
    %p67 = scmp.eq.s32.totalorder %s15, 1
    %p68 = scmp.ne.s32.totalorder %s63, %s65
    %p69 = scmp.eq.s32.totalorder %s15, 0
    %p70 = por %p68, %p69
    %p71 = scmp.ne.s32.totalorder %s63, %s65
    %p72 = scmp.eq.s32.totalorder %s20, 1
    %p73 = por %p71, %p72
    %p74 = scmp.ne.s32.totalorder %s65, %s66
    %p75 = scmp.eq.s32.totalorder %s20, 0
    %p76 = por %p74, %p75
    %p77 = scmp.ne.s32.totalorder %s65, %s66
    %p78 = scmp.eq.s32.totalorder %s21, 1
    %p79 = por %p77, %p78
    %p81 = scmp.ne.s32.totalorder %s66, %s80
    %p82 = scmp.eq.s32.totalorder %s21, 0
    %p83 = por %p81, %p82
    %s85 = sadd.s32 %s84, 1
    %p88 = scmp.eq.s32.totalorder %s15, 1
    %p89 = scmp.ne.s32.totalorder %s84, %s86
    %p90 = scmp.eq.s32.totalorder %s15, 0
    %p91 = por %p89, %p90
    %p92 = scmp.ne.s32.totalorder %s84, %s86
    %p93 = scmp.eq.s32.totalorder %s20, 1
    %p94 = por %p92, %p93
    %p95 = scmp.ne.s32.totalorder %s86, %s87
    %p96 = scmp.eq.s32.totalorder %s20, 0
    %p97 = por %p95, %p96
    %p98 = scmp.ne.s32.totalorder %s86, %s87
    %p99 = scmp.eq.s32.totalorder %s21, 1
    %p100 = por %p98, %p99
    %p102 = scmp.ne.s32.totalorder %s87, %s101
    %p103 = scmp.eq.s32.totalorder %s21, 0
    %p104 = por %p102, %p103
    %s106 = sadd.s32 %s105, 1
    %p109 = scmp.eq.s32.totalorder %s15, 1
    %p110 = scmp.ne.s32.totalorder %s105, %s107
    %p111 = scmp.eq.s32.totalorder %s15, 0
    %p112 = por %p110, %p111
    %p113 = scmp.ne.s32.totalorder %s105, %s107
    %p114 = scmp.eq.s32.totalorder %s20, 1
    %p115 = por %p113, %p114
    %p116 = scmp.ne.s32.totalorder %s107, %s108
    %p117 = scmp.eq.s32.totalorder %s20, 0
    %p118 = por %p116, %p117
    %p119 = scmp.ne.s32.totalorder %s107, %s108
    %p120 = scmp.eq.s32.totalorder %s21, 1
    %p121 = por %p119, %p120
    %p123 = scmp.ne.s32.totalorder %s108, %s122
    %p124 = scmp.eq.s32.totalorder %s21, 0
    %p125 = por %p123, %p124
    %s127 = sadd.s32 %s126, 1
    %p130 = scmp.eq.s32.totalorder %s15, 1
    %p131 = scmp.ne.s32.totalorder %s126, %s128
    %p132 = scmp.eq.s32.totalorder %s15, 0
    %p133 = por %p131, %p132
    %p134 = scmp.ne.s32.totalorder %s126, %s128
    %p135 = scmp.eq.s32.totalorder %s20, 1
    %p136 = por %p134, %p135
    %p137 = scmp.ne.s32.totalorder %s128, %s129
    %p138 = scmp.eq.s32.totalorder %s20, 0
    %p139 = por %p137, %p138
    %p140 = scmp.ne.s32.totalorder %s128, %s129
    %p141 = scmp.eq.s32.totalorder %s21, 1
    %p142 = por %p140, %p141
    %p144 = scmp.ne.s32.totalorder %s129, %s143
    %p145 = scmp.eq.s32.totalorder %s21, 0
    %p146 = por %p144, %p145
    %s147 = ssub.s32 %s22, %s34
    %s148 = ssub.s32 %s23, %s30
    %s149 = sor.u32 %s147, %s148
    %p150 = scmp.eq.s32.totalorder %s149, 0
    %s152 = sadd.s32 %s151, 1
    %s153 = scalar_select %p150, %s151, %s152
    %p156 = pneg %p150
    %p157 = scmp.eq.s32.totalorder %s15, 1
    %p158 = por %p156, %p157
    %p159 = scmp.ne.s32.totalorder %s151, %s154
    %p160 = scmp.eq.s32.totalorder %s15, 0
    %p161 = por %p159, %p160
    %p162 = scmp.ne.s32.totalorder %s151, %s154
    %p163 = scmp.eq.s32.totalorder %s20, 1
    %p164 = por %p162, %p163
    %p165 = scmp.ne.s32.totalorder %s154, %s155
    %p166 = scmp.eq.s32.totalorder %s20, 0
    %p167 = por %p165, %p166
    %p168 = scmp.ne.s32.totalorder %s154, %s155
    %p169 = scmp.eq.s32.totalorder %s21, 1
    %p170 = por %p168, %p169
    %p172 = scmp.ne.s32.totalorder %s155, %s171
    %p173 = scmp.eq.s32.totalorder %s21, 0
    %p174 = por %p172, %p173
    %s175 = ssub.s32 %s22, %s34
    %s176 = ssub.s32 %s23, %s30
    %s177 = sor.u32 %s175, %s176
    %p178 = scmp.eq.s32.totalorder %s177, 0
    %s180 = sadd.s32 %s179, 1
    %s181 = scalar_select %p178, %s179, %s180
    %p184 = pneg %p178
    %p185 = scmp.eq.s32.totalorder %s15, 1
    %p186 = por %p184, %p185
    %p187 = scmp.ne.s32.totalorder %s179, %s182
    %p188 = scmp.eq.s32.totalorder %s15, 0
    %p189 = por %p187, %p188
    %p190 = scmp.ne.s32.totalorder %s179, %s182
    %p191 = scmp.eq.s32.totalorder %s20, 1
    %p192 = por %p190, %p191
    %p193 = scmp.ne.s32.totalorder %s182, %s183
    %p194 = scmp.eq.s32.totalorder %s20, 0
    %p195 = por %p193, %p194
    %p196 = scmp.ne.s32.totalorder %s182, %s183
    %p197 = scmp.eq.s32.totalorder %s21, 1
    %p198 = por %p196, %p197
    %p200 = scmp.ne.s32.totalorder %s183, %s199
    %p201 = scmp.eq.s32.totalorder %s21, 0
    %p202 = por %p200, %p201
    %s203 = ssub.s32 %s22, %s34
    %s204 = ssub.s32 %s23, %s30
    %s205 = sor.u32 %s203, %s204
    %p206 = scmp.eq.s32.totalorder %s205, 0
    %s208 = sadd.s32 %s207, 1
    %s209 = scalar_select %p206, %s207, %s208
    %p212 = pneg %p206
    %p213 = scmp.eq.s32.totalorder %s15, 1
    %p214 = por %p212, %p213
    %p215 = scmp.ne.s32.totalorder %s207, %s210
    %p216 = scmp.eq.s32.totalorder %s15, 0
    %p217 = por %p215, %p216
    %p218 = scmp.ne.s32.totalorder %s207, %s210
    %p219 = scmp.eq.s32.totalorder %s20, 1
    %p220 = por %p218, %p219
    %p221 = scmp.ne.s32.totalorder %s210, %s211
    %p222 = scmp.eq.s32.totalorder %s20, 0
    %p223 = por %p221, %p222
    %p224 = scmp.ne.s32.totalorder %s210, %s211
    %p225 = scmp.eq.s32.totalorder %s21, 1
    %p226 = por %p224, %p225
    %p228 = scmp.ne.s32.totalorder %s211, %s227
    %p229 = scmp.eq.s32.totalorder %s21, 0
    %p230 = por %p228, %p229
    %s231 = ssub.s32 %s22, %s34
    %s232 = ssub.s32 %s23, %s30
    %s233 = sor.u32 %s231, %s232
    %p234 = scmp.eq.s32.totalorder %s233, 0
    %s236 = sadd.s32 %s235, 1
    %s237 = scalar_select %p234, %s235, %s236
    %p240 = pneg %p234
    %p241 = scmp.eq.s32.totalorder %s15, 1
    %p242 = por %p240, %p241
    %p243 = scmp.ne.s32.totalorder %s235, %s238
    %p244 = scmp.eq.s32.totalorder %s15, 0
    %p245 = por %p243, %p244
    %p246 = scmp.ne.s32.totalorder %s235, %s238
    %p247 = scmp.eq.s32.totalorder %s20, 1
    %p248 = por %p246, %p247
    %p249 = scmp.ne.s32.totalorder %s238, %s239
    %p250 = scmp.eq.s32.totalorder %s20, 0
    %p251 = por %p249, %p250
    %p252 = scmp.ne.s32.totalorder %s238, %s239
    %p253 = scmp.eq.s32.totalorder %s21, 1
    %p254 = por %p252, %p253
    %p256 = scmp.ne.s32.totalorder %s239, %s255
    %p257 = scmp.eq.s32.totalorder %s21, 0
    %p258 = por %p256, %p257
    %p259 = scmp.le.s32.totalorder 1, %s15
    %p260 = scmp.lt.s32.totalorder %s15, 3
    %p261 = pnand %p259, %p260
    %p262 = pneg %p261
    // Predicated region
    $region9: #{tpu_custom_call.1} parent=5 // pred_check
      _
    $region10: #{tpu_custom_call.1} parent=5 // pred_check_branch
      %264 = sbr.rel (%p261) target = $region12
    $region11: #{tpu_custom_call.1} parent=5 // pred_region
      %s265 = ssub.s32 %s15, 1
      // Predicated region
      $region13: #{tpu_custom_call.1} parent=11 // pred_check
        %p266 = pneg %p76
      $region14: #{tpu_custom_call.1} parent=11 // pred_check_branch
        %268 = sbr.rel (%p266) target = $region16
      $region15: #{tpu_custom_call.1} parent=11 // pred_region
        _
      $region16: #{tpu_custom_call.1} parent=11 // pred_fallthru
        _
      // Predicated region
      $region17: #{tpu_custom_call.1} parent=11 // pred_check
        %p269 = pneg %p97
      $region18: #{tpu_custom_call.1} parent=11 // pred_check_branch
        %271 = sbr.rel (%p269) target = $region20
      $region19: #{tpu_custom_call.1} parent=11 // pred_region
        _
      $region20: #{tpu_custom_call.1} parent=11 // pred_fallthru
        _
      // Predicated region
      $region21: #{tpu_custom_call.1} parent=11 // pred_check
        %p272 = pneg %p118
      $region22: #{tpu_custom_call.1} parent=11 // pred_check_branch
        %274 = sbr.rel (%p272) target = $region24
      $region23: #{tpu_custom_call.1} parent=11 // pred_region
        _
      $region24: #{tpu_custom_call.1} parent=11 // pred_fallthru
        _
      // Predicated region
      $region25: #{tpu_custom_call.1} parent=11 // pred_check
        %p275 = pneg %p139
      $region26: #{tpu_custom_call.1} parent=11 // pred_check_branch
        %277 = sbr.rel (%p275) target = $region28
      $region27: #{tpu_custom_call.1} parent=11 // pred_region
        _
      $region28: #{tpu_custom_call.1} parent=11 // pred_fallthru
        _
    $region12: #{tpu_custom_call.1} parent=5 // pred_fallthru
      _
    %p278 = scmp.lt.s32.totalorder %s15, 2
    // Predicated region
    $region29: #{tpu_custom_call.1} parent=5 // pred_check
      %p279 = pneg %p278
    $region30: #{tpu_custom_call.1} parent=5 // pred_check_branch
      %281 = sbr.rel (%p279) target = $region32
    $region31: #{tpu_custom_call.1} parent=5 // pred_region
      // Predicated region
      $region33: #{tpu_custom_call.1} parent=31 // pred_check
        %p282 = pneg %p49
      $region34: #{tpu_custom_call.1} parent=31 // pred_check_branch
        %284 = sbr.rel (%p282) target = $region36
      $region35: #{tpu_custom_call.1} parent=31 // pred_region
        %s285 = smul.u32 32, %s23
        %p286 = scmp.lt.s32.totalorder %s22, 1
        %s287 = scalar_select %p286, %s22, 1
        %p288 = scmp.lt.s32.totalorder %s285, 31
        %s289 = scalar_select %p288, %s285, 31
        %s290 = smul.addr %s287, 32
        %s291 = sadd.s32 %s289, %s290
        %s292 = smul.addr %s291, 4
        %s293 = scalar_lea.vmem %s0, %s292
        %s294 = smul.u32 32, %s23
      $region36: #{tpu_custom_call.1} parent=31 // pred_fallthru
        _
    $region32: #{tpu_custom_call.1} parent=5 // pred_fallthru
      _
    %p295 = scmp.le.s32.totalorder 1, %s15
    %p296 = scmp.lt.s32.totalorder %s15, 3
    %p297 = pnand %p295, %p296
    %p298 = pneg %p297
    // Predicated region
    $region37: #{tpu_custom_call.1} parent=5 // pred_check
      _
    $region38: #{tpu_custom_call.1} parent=5 // pred_check_branch
      %300 = sbr.rel (%p297) target = $region40
    $region39: #{tpu_custom_call.1} parent=5 // pred_region
      %s301 = ssub.s32 %s15, 1
      %s302 = smul.u32 32, %s25
      %p303 = scmp.lt.s32.totalorder %s24, 1
      %s304 = scalar_select %p303, %s24, 1
      %p305 = scmp.lt.s32.totalorder %s302, 31
      %s306 = scalar_select %p305, %s302, 31
      %s307 = smul.addr %s304, 32
      %s308 = sadd.s32 %s306, %s307
      %s309 = smul.addr %s308, 4
      %s310 = scalar_lea.vmem %s0, %s309
      %p311 = pneg %p55
      %p312 = pneg %p52
      %p313 = pneg %p76
      %p314 = pneg %p73
      %p315 = pneg %p97
      %p316 = pneg %p94
      %p317 = pneg %p118
      %p318 = pneg %p115
      %p319 = pneg %p139
      %p320 = pneg %p136
      %p321 = pneg %p167
      %p322 = pneg %p164
      %s323 = smul.u32 32, %s25
      %p324 = scmp.lt.s32.totalorder %s24, 1
      %s325 = scalar_select %p324, %s24, 1
      %p326 = scmp.lt.s32.totalorder %s323, 31
      %s327 = scalar_select %p326, %s323, 31
      %s328 = smul.addr %s325, 32
      %s329 = sadd.s32 %s327, %s328
      %s330 = smul.addr %s329, 4
      %s331 = scalar_lea.vmem %s5, %s330
      %p332 = pneg %p195
      %p333 = pneg %p192
      %s334 = smul.u32 32, %s25
      %p335 = scmp.lt.s32.totalorder %s24, 1
      %s336 = scalar_select %p335, %s24, 1
      %p337 = scmp.lt.s32.totalorder %s334, 31
      %s338 = scalar_select %p337, %s334, 31
      %s339 = smul.addr %s336, 32
      %s340 = sadd.s32 %s338, %s339
      %s341 = smul.addr %s340, 4
      %s342 = scalar_lea.vmem %s6, %s341
      %p343 = pneg %p223
      %p344 = pneg %p220
      %s345 = smul.u32 32, %s25
      %p346 = scmp.lt.s32.totalorder %s24, 1
      %s347 = scalar_select %p346, %s24, 1
      %p348 = scmp.lt.s32.totalorder %s345, 31
      %s349 = scalar_select %p348, %s345, 31
      %s350 = smul.addr %s347, 32
      %s351 = sadd.s32 %s349, %s350
      %s352 = smul.addr %s351, 4
      %s353 = scalar_lea.vmem %s7, %s352
      %p354 = pneg %p251
      %p355 = pneg %p248
      %s356 = smul.u32 32, %s25
      %p357 = scmp.lt.s32.totalorder %s24, 1
      %s358 = scalar_select %p357, %s24, 1
      %p359 = scmp.lt.s32.totalorder %s356, 31
      %s360 = scalar_select %p359, %s356, 31
      %s361 = smul.addr %s358, 32
      %s362 = sadd.s32 %s360, %s361
      %s363 = smul.addr %s362, 8
      %s364 = scalar_lea.vmem %s8, %s363
      %s365 = smul.u32 32, %s25
      %p366 = scmp.lt.s32.totalorder %s24, 1
      %s367 = scalar_select %p366, %s24, 1
      %p368 = scmp.lt.s32.totalorder %s365, 31
      %s369 = scalar_select %p368, %s365, 31
      %s370 = smul.addr %s367, 32
      %s371 = sadd.s32 %s369, %s370
      %s372 = smul.addr %s371, 4
      %s373 = scalar_lea.vmem %s0, %s372
      %s374 = smul.u32 32, %s25
      %s375 = smul.u32 32, %s25
      %p376 = scmp.lt.s32.totalorder %s24, 1
      %s377 = scalar_select %p376, %s24, 1
      %p378 = scmp.lt.s32.totalorder %s375, 31
      %s379 = scalar_select %p378, %s375, 31
      %s380 = smul.addr %s377, 32
      %s381 = sadd.s32 %s379, %s380
      %s382 = smul.addr %s381, 4
      %s383 = scalar_lea.vmem %s5, %s382
      %s384 = smul.u32 32, %s25
      %s385 = smul.u32 32, %s25
      %p386 = scmp.lt.s32.totalorder %s24, 1
      %s387 = scalar_select %p386, %s24, 1
      %p388 = scmp.lt.s32.totalorder %s385, 31
      %s389 = scalar_select %p388, %s385, 31
      %s390 = smul.addr %s387, 32
      %s391 = sadd.s32 %s389, %s390
      %s392 = smul.addr %s391, 4
      %s393 = scalar_lea.vmem %s6, %s392
      %s394 = smul.u32 32, %s25
      %s395 = smul.u32 32, %s25
      %p396 = scmp.lt.s32.totalorder %s24, 1
      %s397 = scalar_select %p396, %s24, 1
      %p398 = scmp.lt.s32.totalorder %s395, 31
      %s399 = scalar_select %p398, %s395, 31
      %s400 = smul.addr %s397, 32
      %s401 = sadd.s32 %s399, %s400
      %s402 = smul.addr %s401, 4
      %s403 = scalar_lea.vmem %s7, %s402
      %s404 = smul.u32 32, %s25
      %s405 = smul.u32 32, %s25
      %p406 = scmp.lt.s32.totalorder %s24, 1
      %s407 = scalar_select %p406, %s24, 1
      %p408 = scmp.lt.s32.totalorder %s405, 31
      %s409 = scalar_select %p408, %s405, 31
      %s410 = smul.addr %s407, 32
      %s411 = sadd.s32 %s409, %s410
      %s412 = smul.addr %s411, 8
      %s413 = scalar_lea.vmem %s8, %s412
      %s414 = smul.u32 32, %s25
      %v416 = vld [vmem:[%s373] sm:$0xf]
      %v417 = vld [vmem:[%s373 + $0x4] sm:$0xf]
      %v418 = vld [vmem:[%s373 + $0x8] sm:$0xf]
      %v419 = vld [vmem:[%s373 + $0xc] sm:$0xf]
      %v420 = vld [vmem:[%s373 + $0x10] sm:$0xf]
      %v421 = vld [vmem:[%s373 + $0x14] sm:$0xf]
      %v422 = vld [vmem:[%s373 + $0x18] sm:$0xf]
      %v423 = vld [vmem:[%s373 + $0x1c] sm:$0xf]
      %v424 = vld [vmem:[%s373 + $0x20] sm:$0xf]
      %v425 = vld [vmem:[%s373 + $0x24] sm:$0xf]
      %v426 = vld [vmem:[%s373 + $0x28] sm:$0xf]
      %v427 = vld [vmem:[%s373 + $0x2c] sm:$0xf]
      %v428 = vld [vmem:[%s373 + $0x30] sm:$0xf]
      %v429 = vld [vmem:[%s373 + $0x34] sm:$0xf]
      %v430 = vld [vmem:[%s373 + $0x38] sm:$0xf]
      %v431 = vld [vmem:[%s373 + $0x3c] sm:$0xf]
      %v432 = vld [vmem:[%s373 + $0x40] sm:$0xf]
      %v433 = vld [vmem:[%s373 + $0x44] sm:$0xf]
      %v434 = vld [vmem:[%s373 + $0x48] sm:$0xf]
      %v435 = vld [vmem:[%s373 + $0x4c] sm:$0xf]
      %v436 = vld [vmem:[%s373 + $0x50] sm:$0xf]
      %v437 = vld [vmem:[%s373 + $0x54] sm:$0xf]
      %v438 = vld [vmem:[%s373 + $0x58] sm:$0xf]
      %v439 = vld [vmem:[%s373 + $0x5c] sm:$0xf]
      %v440 = vld [vmem:[%s373 + $0x60] sm:$0xf]
      %v441 = vld [vmem:[%s373 + $0x64] sm:$0xf]
      %v442 = vld [vmem:[%s373 + $0x68] sm:$0xf]
      %v443 = vld [vmem:[%s373 + $0x6c] sm:$0xf]
      %v444 = vld [vmem:[%s373 + $0x70] sm:$0xf]
      %v445 = vld [vmem:[%s373 + $0x74] sm:$0xf]
      %v446 = vld [vmem:[%s373 + $0x78] sm:$0xf]
      %v447 = vld [vmem:[%s373 + $0x7c] sm:$0xf]
      %v448 = vld [vmem:[%s1] sm:$0xf]
      %v449 = vld [vmem:[%s1 + $0x4] sm:$0xf]
      %v450 = vld [vmem:[%s1 + $0x8] sm:$0xf]
      %v451 = vld [vmem:[%s1 + $0xc] sm:$0xf]
      %v484 = vunpack.c.l.b16 %v416
      %v485 = vunpack.c.l.b16 %v417
      %v486 = vunpack.c.l.b16 %v418
      %v487 = vunpack.c.l.b16 %v419
      %v488 = vunpack.c.l.b16 %v420
      %v489 = vunpack.c.l.b16 %v421
      %v490 = vunpack.c.l.b16 %v422
      %v491 = vunpack.c.l.b16 %v423
      %v492 = vunpack.c.l.b16 %v424
      %v493 = vunpack.c.l.b16 %v425
      %v494 = vunpack.c.l.b16 %v426
      %v495 = vunpack.c.l.b16 %v427
      %v496 = vunpack.c.l.b16 %v428
      %v497 = vunpack.c.l.b16 %v429
      %v498 = vunpack.c.l.b16 %v430
      %v499 = vunpack.c.l.b16 %v431
      %v500 = vunpack.c.l.b16 %v432
      %v501 = vunpack.c.l.b16 %v433
      %v502 = vunpack.c.l.b16 %v434
      %v503 = vunpack.c.l.b16 %v435
      %v504 = vunpack.c.l.b16 %v436
      %v505 = vunpack.c.l.b16 %v437
      %v506 = vunpack.c.l.b16 %v438
      %v507 = vunpack.c.l.b16 %v439
      %v508 = vunpack.c.l.b16 %v440
      %v509 = vunpack.c.l.b16 %v441
      %v510 = vunpack.c.l.b16 %v442
      %v511 = vunpack.c.l.b16 %v443
      %v512 = vunpack.c.l.b16 %v444
      %v513 = vunpack.c.l.b16 %v445
      %v514 = vunpack.c.l.b16 %v446
      %v515 = vunpack.c.l.b16 %v447
      %v516 = vpack.c.b16 %v485, %v484
      %v517 = vpack.c.b16 %v487, %v486
      %v518 = vpack.c.b16 %v489, %v488
      %v519 = vpack.c.b16 %v491, %v490
      %v520 = vpack.c.b16 %v493, %v492
      %v521 = vpack.c.b16 %v495, %v494
      %v522 = vpack.c.b16 %v497, %v496
      %v523 = vpack.c.b16 %v499, %v498
      %v524 = vpack.c.b16 %v501, %v500
      %v525 = vpack.c.b16 %v503, %v502
      %v526 = vpack.c.b16 %v505, %v504
      %v527 = vpack.c.b16 %v507, %v506
      %v528 = vpack.c.b16 %v509, %v508
      %v529 = vpack.c.b16 %v511, %v510
      %v530 = vpack.c.b16 %v513, %v512
      %v531 = vpack.c.b16 %v515, %v514
      %v536 = vunpack.c.l.b16 %v448
      %v537 = vunpack.c.l.b16 %v449
      %v538 = vunpack.c.l.b16 %v450
      %v539 = vunpack.c.l.b16 %v451
      %v540 = vpack.c.b16 %v537, %v536
      %v541 = vpack.c.b16 %v539, %v538
      %vm544 = vcmask 261120
      %v546 = vsel %vm544, %v516, 0
      %v549 = vsel %vm544, %v517, 0
      %v552 = vsel %vm544, %v518, 0
      %v555 = vsel %vm544, %v519, 0
      %v558 = vsel %vm544, %v520, 0
      %v561 = vsel %vm544, %v521, 0
      %v564 = vsel %vm544, %v522, 0
      %v567 = vsel %vm544, %v523, 0
      %v570 = vsel %vm544, %v524, 0
      %v573 = vsel %vm544, %v525, 0
      %v576 = vsel %vm544, %v526, 0
      %v579 = vsel %vm544, %v527, 0
      %v582 = vsel %vm544, %v528, 0
      %v585 = vsel %vm544, %v529, 0
      %v588 = vsel %vm544, %v530, 0
      %v591 = vsel %vm544, %v531, 0
      %593 = vmatpush.bf16.msra.mxu0 0
      %594 = vmatpush.bf16.msra.mxu0 0
      %595 = vmatpush.bf16.msra.mxu0 0
      %596 = vmatpush.bf16.msra.mxu0 0
      %597 = vmatpush.bf16.msra.mxu0 0
      %598 = vmatpush.bf16.msra.mxu0 0
      %599 = vmatpush.bf16.msra.mxu0 %v541
      %600 = vmatpush.bf16.msra.mxu0 %v540
      %601 = vmatmul.bf16.gmra.mxu0 %v546
      %v602 = vpop.f32.mrf.mxu0
      %v603 = vadd.f32 0.0, %v602
      %v604 = vpop.f32.mrf.mxu0
      %v605 = vadd.f32 0.0, %v604
      %606 = vmatmul.bf16.gmra.mxu0 %v549
      %v607 = vpop.f32.mrf.mxu0
      %v608 = vadd.f32 0.0, %v607
      %v609 = vpop.f32.mrf.mxu0
      %v610 = vadd.f32 0.0, %v609
      %611 = vmatmul.bf16.gmra.mxu0 %v552
      %v612 = vpop.f32.mrf.mxu0
      %v613 = vadd.f32 0.0, %v612
      %v614 = vpop.f32.mrf.mxu0
      %v615 = vadd.f32 0.0, %v614
      %616 = vmatmul.bf16.gmra.mxu0 %v555
      %v617 = vpop.f32.mrf.mxu0
      %v618 = vadd.f32 0.0, %v617
      %v619 = vpop.f32.mrf.mxu0
      %v620 = vadd.f32 0.0, %v619
      %621 = vmatmul.bf16.gmra.mxu0 %v558
      %v622 = vpop.f32.mrf.mxu0
      %v623 = vadd.f32 0.0, %v622
      %v624 = vpop.f32.mrf.mxu0
      %v625 = vadd.f32 0.0, %v624
      %626 = vmatmul.bf16.gmra.mxu0 %v561
      %v627 = vpop.f32.mrf.mxu0
      %v628 = vadd.f32 0.0, %v627
      %v629 = vpop.f32.mrf.mxu0
      %v630 = vadd.f32 0.0, %v629
      %631 = vmatmul.bf16.gmra.mxu0 %v564
      %v632 = vpop.f32.mrf.mxu0
      %v633 = vadd.f32 0.0, %v632
      %v634 = vpop.f32.mrf.mxu0
      %v635 = vadd.f32 0.0, %v634
      %636 = vmatmul.bf16.gmra.mxu0 %v567
      %v637 = vpop.f32.mrf.mxu0
      %v638 = vadd.f32 0.0, %v637
      %v639 = vpop.f32.mrf.mxu0
      %v640 = vadd.f32 0.0, %v639
      %641 = vmatmul.bf16.gmra.mxu0 %v570
      %v642 = vpop.f32.mrf.mxu0
      %v643 = vadd.f32 0.0, %v642
      %v644 = vpop.f32.mrf.mxu0
      %v645 = vadd.f32 0.0, %v644
      %646 = vmatmul.bf16.gmra.mxu0 %v573
      %v647 = vpop.f32.mrf.mxu0
      %v648 = vadd.f32 0.0, %v647
      %v649 = vpop.f32.mrf.mxu0
      %v650 = vadd.f32 0.0, %v649
      %651 = vmatmul.bf16.gmra.mxu0 %v576
      %v652 = vpop.f32.mrf.mxu0
      %v653 = vadd.f32 0.0, %v652
      %v654 = vpop.f32.mrf.mxu0
      %v655 = vadd.f32 0.0, %v654
      %656 = vmatmul.bf16.gmra.mxu0 %v579
      %v657 = vpop.f32.mrf.mxu0
      %v658 = vadd.f32 0.0, %v657
      %v659 = vpop.f32.mrf.mxu0
      %v660 = vadd.f32 0.0, %v659
      %661 = vmatmul.bf16.gmra.mxu0 %v582
      %v662 = vpop.f32.mrf.mxu0
      %v663 = vadd.f32 0.0, %v662
      %v664 = vpop.f32.mrf.mxu0
      %v665 = vadd.f32 0.0, %v664
      %666 = vmatmul.bf16.gmra.mxu0 %v585
      %v667 = vpop.f32.mrf.mxu0
      %v668 = vadd.f32 0.0, %v667
      %v669 = vpop.f32.mrf.mxu0
      %v670 = vadd.f32 0.0, %v669
      %671 = vmatmul.bf16.gmra.mxu0 %v588
      %v672 = vpop.f32.mrf.mxu0
      %v673 = vadd.f32 0.0, %v672
      %v674 = vpop.f32.mrf.mxu0
      %v675 = vadd.f32 0.0, %v674
      %676 = vmatmul.bf16.gmra.mxu0 %v591
      %v677 = vpop.f32.mrf.mxu0
      %v678 = vadd.f32 0.0, %v677
      %v679 = vpop.f32.mrf.mxu0
      %v680 = vadd.f32 0.0, %v679
      %681 = vdwg.mxu0
      %v682 = vpack.c.bf16 %v603, %v603
      %v683 = vpack.c.bf16 %v605, %v605
      %v684 = vpack.c.bf16 %v608, %v608
      %v685 = vpack.c.bf16 %v610, %v610
      %v686 = vpack.c.bf16 %v613, %v613
      %v687 = vpack.c.bf16 %v615, %v615
      %v688 = vpack.c.bf16 %v618, %v618
      %v689 = vpack.c.bf16 %v620, %v620
      %v690 = vpack.c.bf16 %v623, %v623
      %v691 = vpack.c.bf16 %v625, %v625
      %v692 = vpack.c.bf16 %v628, %v628
      %v693 = vpack.c.bf16 %v630, %v630
      %v694 = vpack.c.bf16 %v633, %v633
      %v695 = vpack.c.bf16 %v635, %v635
      %v696 = vpack.c.bf16 %v638, %v638
      %v697 = vpack.c.bf16 %v640, %v640
      %v698 = vpack.c.bf16 %v643, %v643
      %v699 = vpack.c.bf16 %v645, %v645
      %v700 = vpack.c.bf16 %v648, %v648
      %v701 = vpack.c.bf16 %v650, %v650
      %v702 = vpack.c.bf16 %v653, %v653
      %v703 = vpack.c.bf16 %v655, %v655
      %v704 = vpack.c.bf16 %v658, %v658
      %v705 = vpack.c.bf16 %v660, %v660
      %v706 = vpack.c.bf16 %v663, %v663
      %v707 = vpack.c.bf16 %v665, %v665
      %v708 = vpack.c.bf16 %v668, %v668
      %v709 = vpack.c.bf16 %v670, %v670
      %v710 = vpack.c.bf16 %v673, %v673
      %v711 = vpack.c.bf16 %v675, %v675
      %v712 = vpack.c.bf16 %v678, %v678
      %v713 = vpack.c.bf16 %v680, %v680
      %vm714 = vcmask 257024
      %715 = vst.msk [vmem:[%s383] sm:$0xf] %vm714, %v682
      %716 = vst.msk [vmem:[%s383 + $0x4] sm:$0xf] %vm714, %v683
      %717 = vst.msk [vmem:[%s383 + $0x8] sm:$0xf] %vm714, %v684
      %718 = vst.msk [vmem:[%s383 + $0xc] sm:$0xf] %vm714, %v685
      %719 = vst.msk [vmem:[%s383 + $0x10] sm:$0xf] %vm714, %v686
      %720 = vst.msk [vmem:[%s383 + $0x14] sm:$0xf] %vm714, %v687
      %721 = vst.msk [vmem:[%s383 + $0x18] sm:$0xf] %vm714, %v688
      %722 = vst.msk [vmem:[%s383 + $0x1c] sm:$0xf] %vm714, %v689
      %723 = vst.msk [vmem:[%s383 + $0x20] sm:$0xf] %vm714, %v690
      %724 = vst.msk [vmem:[%s383 + $0x24] sm:$0xf] %vm714, %v691
      %725 = vst.msk [vmem:[%s383 + $0x28] sm:$0xf] %vm714, %v692
      %726 = vst.msk [vmem:[%s383 + $0x2c] sm:$0xf] %vm714, %v693
      %727 = vst.msk [vmem:[%s383 + $0x30] sm:$0xf] %vm714, %v694
      %728 = vst.msk [vmem:[%s383 + $0x34] sm:$0xf] %vm714, %v695
      %729 = vst.msk [vmem:[%s383 + $0x38] sm:$0xf] %vm714, %v696
      %730 = vst.msk [vmem:[%s383 + $0x3c] sm:$0xf] %vm714, %v697
      %731 = vst.msk [vmem:[%s383 + $0x40] sm:$0xf] %vm714, %v698
      %732 = vst.msk [vmem:[%s383 + $0x44] sm:$0xf] %vm714, %v699
      %733 = vst.msk [vmem:[%s383 + $0x48] sm:$0xf] %vm714, %v700
      %734 = vst.msk [vmem:[%s383 + $0x4c] sm:$0xf] %vm714, %v701
      %735 = vst.msk [vmem:[%s383 + $0x50] sm:$0xf] %vm714, %v702
      %736 = vst.msk [vmem:[%s383 + $0x54] sm:$0xf] %vm714, %v703
      %737 = vst.msk [vmem:[%s383 + $0x58] sm:$0xf] %vm714, %v704
      %738 = vst.msk [vmem:[%s383 + $0x5c] sm:$0xf] %vm714, %v705
      %739 = vst.msk [vmem:[%s383 + $0x60] sm:$0xf] %vm714, %v706
      %740 = vst.msk [vmem:[%s383 + $0x64] sm:$0xf] %vm714, %v707
      %741 = vst.msk [vmem:[%s383 + $0x68] sm:$0xf] %vm714, %v708
      %742 = vst.msk [vmem:[%s383 + $0x6c] sm:$0xf] %vm714, %v709
      %743 = vst.msk [vmem:[%s383 + $0x70] sm:$0xf] %vm714, %v710
      %744 = vst.msk [vmem:[%s383 + $0x74] sm:$0xf] %vm714, %v711
      %745 = vst.msk [vmem:[%s383 + $0x78] sm:$0xf] %vm714, %v712
      %746 = vst.msk [vmem:[%s383 + $0x7c] sm:$0xf] %vm714, %v713
      %v747 = vld [vmem:[%s2] sm:$0xf]
      %v748 = vld [vmem:[%s2 + $0x4] sm:$0xf]
      %v749 = vld [vmem:[%s2 + $0x8] sm:$0xf]
      %v750 = vld [vmem:[%s2 + $0xc] sm:$0xf]
      %v755 = vunpack.c.l.b16 %v747
      %v756 = vunpack.c.l.b16 %v748
      %v757 = vunpack.c.l.b16 %v749
      %v758 = vunpack.c.l.b16 %v750
      %v759 = vpack.c.b16 %v756, %v755
      %v760 = vpack.c.b16 %v758, %v757
      %763 = vmatpush.bf16.msra.mxu0 0
      %764 = vmatpush.bf16.msra.mxu0 0
      %765 = vmatpush.bf16.msra.mxu0 0
      %766 = vmatpush.bf16.msra.mxu0 0
      %767 = vmatpush.bf16.msra.mxu0 0
      %768 = vmatpush.bf16.msra.mxu0 0
      %769 = vmatpush.bf16.msra.mxu0 %v760
      %770 = vmatpush.bf16.msra.mxu0 %v759
      %771 = vmatmul.bf16.gmra.mxu0 %v546
      %v772 = vpop.f32.mrf.mxu0
      %v773 = vadd.f32 0.0, %v772
      %v774 = vpop.f32.mrf.mxu0
      %v775 = vadd.f32 0.0, %v774
      %776 = vmatmul.bf16.gmra.mxu0 %v549
      %v777 = vpop.f32.mrf.mxu0
      %v778 = vadd.f32 0.0, %v777
      %v779 = vpop.f32.mrf.mxu0
      %v780 = vadd.f32 0.0, %v779
      %781 = vmatmul.bf16.gmra.mxu0 %v552
      %v782 = vpop.f32.mrf.mxu0
      %v783 = vadd.f32 0.0, %v782
      %v784 = vpop.f32.mrf.mxu0
      %v785 = vadd.f32 0.0, %v784
      %786 = vmatmul.bf16.gmra.mxu0 %v555
      %v787 = vpop.f32.mrf.mxu0
      %v788 = vadd.f32 0.0, %v787
      %v789 = vpop.f32.mrf.mxu0
      %v790 = vadd.f32 0.0, %v789
      %791 = vmatmul.bf16.gmra.mxu0 %v558
      %v792 = vpop.f32.mrf.mxu0
      %v793 = vadd.f32 0.0, %v792
      %v794 = vpop.f32.mrf.mxu0
      %v795 = vadd.f32 0.0, %v794
      %796 = vmatmul.bf16.gmra.mxu0 %v561
      %v797 = vpop.f32.mrf.mxu0
      %v798 = vadd.f32 0.0, %v797
      %v799 = vpop.f32.mrf.mxu0
      %v800 = vadd.f32 0.0, %v799
      %801 = vmatmul.bf16.gmra.mxu0 %v564
      %v802 = vpop.f32.mrf.mxu0
      %v803 = vadd.f32 0.0, %v802
      %v804 = vpop.f32.mrf.mxu0
      %v805 = vadd.f32 0.0, %v804
      %806 = vmatmul.bf16.gmra.mxu0 %v567
      %v807 = vpop.f32.mrf.mxu0
      %v808 = vadd.f32 0.0, %v807
      %v809 = vpop.f32.mrf.mxu0
      %v810 = vadd.f32 0.0, %v809
      %811 = vmatmul.bf16.gmra.mxu0 %v570
      %v812 = vpop.f32.mrf.mxu0
      %v813 = vadd.f32 0.0, %v812
      %v814 = vpop.f32.mrf.mxu0
      %v815 = vadd.f32 0.0, %v814
      %816 = vmatmul.bf16.gmra.mxu0 %v573
      %v817 = vpop.f32.mrf.mxu0
      %v818 = vadd.f32 0.0, %v817
      %v819 = vpop.f32.mrf.mxu0
      %v820 = vadd.f32 0.0, %v819
      %821 = vmatmul.bf16.gmra.mxu0 %v576
      %v822 = vpop.f32.mrf.mxu0
      %v823 = vadd.f32 0.0, %v822
      %v824 = vpop.f32.mrf.mxu0
      %v825 = vadd.f32 0.0, %v824
      %826 = vmatmul.bf16.gmra.mxu0 %v579
      %v827 = vpop.f32.mrf.mxu0
      %v828 = vadd.f32 0.0, %v827
      %v829 = vpop.f32.mrf.mxu0
      %v830 = vadd.f32 0.0, %v829
      %831 = vmatmul.bf16.gmra.mxu0 %v582
      %v832 = vpop.f32.mrf.mxu0
      %v833 = vadd.f32 0.0, %v832
      %v834 = vpop.f32.mrf.mxu0
      %v835 = vadd.f32 0.0, %v834
      %836 = vmatmul.bf16.gmra.mxu0 %v585
      %v837 = vpop.f32.mrf.mxu0
      %v838 = vadd.f32 0.0, %v837
      %v839 = vpop.f32.mrf.mxu0
      %v840 = vadd.f32 0.0, %v839
      %841 = vmatmul.bf16.gmra.mxu0 %v588
      %v842 = vpop.f32.mrf.mxu0
      %v843 = vadd.f32 0.0, %v842
      %v844 = vpop.f32.mrf.mxu0
      %v845 = vadd.f32 0.0, %v844
      %846 = vmatmul.bf16.gmra.mxu0 %v591
      %v847 = vpop.f32.mrf.mxu0
      %v848 = vadd.f32 0.0, %v847
      %v849 = vpop.f32.mrf.mxu0
      %v850 = vadd.f32 0.0, %v849
      %851 = vdwg.mxu0
      %v852 = vpack.c.bf16 %v773, %v773
      %v853 = vpack.c.bf16 %v775, %v775
      %v854 = vpack.c.bf16 %v778, %v778
      %v855 = vpack.c.bf16 %v780, %v780
      %v856 = vpack.c.bf16 %v783, %v783
      %v857 = vpack.c.bf16 %v785, %v785
      %v858 = vpack.c.bf16 %v788, %v788
      %v859 = vpack.c.bf16 %v790, %v790
      %v860 = vpack.c.bf16 %v793, %v793
      %v861 = vpack.c.bf16 %v795, %v795
      %v862 = vpack.c.bf16 %v798, %v798
      %v863 = vpack.c.bf16 %v800, %v800
      %v864 = vpack.c.bf16 %v803, %v803
      %v865 = vpack.c.bf16 %v805, %v805
      %v866 = vpack.c.bf16 %v808, %v808
      %v867 = vpack.c.bf16 %v810, %v810
      %v868 = vpack.c.bf16 %v813, %v813
      %v869 = vpack.c.bf16 %v815, %v815
      %v870 = vpack.c.bf16 %v818, %v818
      %v871 = vpack.c.bf16 %v820, %v820
      %v872 = vpack.c.bf16 %v823, %v823
      %v873 = vpack.c.bf16 %v825, %v825
      %v874 = vpack.c.bf16 %v828, %v828
      %v875 = vpack.c.bf16 %v830, %v830
      %v876 = vpack.c.bf16 %v833, %v833
      %v877 = vpack.c.bf16 %v835, %v835
      %v878 = vpack.c.bf16 %v838, %v838
      %v879 = vpack.c.bf16 %v840, %v840
      %v880 = vpack.c.bf16 %v843, %v843
      %v881 = vpack.c.bf16 %v845, %v845
      %v882 = vpack.c.bf16 %v848, %v848
      %v883 = vpack.c.bf16 %v850, %v850
      %884 = vst.msk [vmem:[%s393] sm:$0xf] %vm714, %v852
      %885 = vst.msk [vmem:[%s393 + $0x4] sm:$0xf] %vm714, %v853
      %886 = vst.msk [vmem:[%s393 + $0x8] sm:$0xf] %vm714, %v854
      %887 = vst.msk [vmem:[%s393 + $0xc] sm:$0xf] %vm714, %v855
      %888 = vst.msk [vmem:[%s393 + $0x10] sm:$0xf] %vm714, %v856
      %889 = vst.msk [vmem:[%s393 + $0x14] sm:$0xf] %vm714, %v857
      %890 = vst.msk [vmem:[%s393 + $0x18] sm:$0xf] %vm714, %v858
      %891 = vst.msk [vmem:[%s393 + $0x1c] sm:$0xf] %vm714, %v859
      %892 = vst.msk [vmem:[%s393 + $0x20] sm:$0xf] %vm714, %v860
      %893 = vst.msk [vmem:[%s393 + $0x24] sm:$0xf] %vm714, %v861
      %894 = vst.msk [vmem:[%s393 + $0x28] sm:$0xf] %vm714, %v862
      %895 = vst.msk [vmem:[%s393 + $0x2c] sm:$0xf] %vm714, %v863
      %896 = vst.msk [vmem:[%s393 + $0x30] sm:$0xf] %vm714, %v864
      %897 = vst.msk [vmem:[%s393 + $0x34] sm:$0xf] %vm714, %v865
      %898 = vst.msk [vmem:[%s393 + $0x38] sm:$0xf] %vm714, %v866
      %899 = vst.msk [vmem:[%s393 + $0x3c] sm:$0xf] %vm714, %v867
      %900 = vst.msk [vmem:[%s393 + $0x40] sm:$0xf] %vm714, %v868
      %901 = vst.msk [vmem:[%s393 + $0x44] sm:$0xf] %vm714, %v869
      %902 = vst.msk [vmem:[%s393 + $0x48] sm:$0xf] %vm714, %v870
      %903 = vst.msk [vmem:[%s393 + $0x4c] sm:$0xf] %vm714, %v871
      %904 = vst.msk [vmem:[%s393 + $0x50] sm:$0xf] %vm714, %v872
      %905 = vst.msk [vmem:[%s393 + $0x54] sm:$0xf] %vm714, %v873
      %906 = vst.msk [vmem:[%s393 + $0x58] sm:$0xf] %vm714, %v874
      %907 = vst.msk [vmem:[%s393 + $0x5c] sm:$0xf] %vm714, %v875
      %908 = vst.msk [vmem:[%s393 + $0x60] sm:$0xf] %vm714, %v876
      %909 = vst.msk [vmem:[%s393 + $0x64] sm:$0xf] %vm714, %v877
      %910 = vst.msk [vmem:[%s393 + $0x68] sm:$0xf] %vm714, %v878
      %911 = vst.msk [vmem:[%s393 + $0x6c] sm:$0xf] %vm714, %v879
      %912 = vst.msk [vmem:[%s393 + $0x70] sm:$0xf] %vm714, %v880
      %913 = vst.msk [vmem:[%s393 + $0x74] sm:$0xf] %vm714, %v881
      %914 = vst.msk [vmem:[%s393 + $0x78] sm:$0xf] %vm714, %v882
      %915 = vst.msk [vmem:[%s393 + $0x7c] sm:$0xf] %vm714, %v883
      %v916 = vld [vmem:[%s3] sm:$0xf]
      %v917 = vld [vmem:[%s3 + $0x4] sm:$0xf]
      %v918 = vld [vmem:[%s3 + $0x8] sm:$0xf]
      %v919 = vld [vmem:[%s3 + $0xc] sm:$0xf]
      %v924 = vunpack.c.l.b16 %v916
      %v925 = vunpack.c.l.b16 %v917
      %v926 = vunpack.c.l.b16 %v918
      %v927 = vunpack.c.l.b16 %v919
      %v928 = vpack.c.b16 %v925, %v924
      %v929 = vpack.c.b16 %v927, %v926
      %932 = vmatpush.bf16.msra.mxu0 0
      %933 = vmatpush.bf16.msra.mxu0 0
      %934 = vmatpush.bf16.msra.mxu0 0
      %935 = vmatpush.bf16.msra.mxu0 0
      %936 = vmatpush.bf16.msra.mxu0 0
      %937 = vmatpush.bf16.msra.mxu0 0
      %938 = vmatpush.bf16.msra.mxu0 %v929
      %939 = vmatpush.bf16.msra.mxu0 %v928
      %940 = vmatmul.bf16.gmra.mxu0 %v546
      %v941 = vpop.f32.mrf.mxu0
      %v942 = vadd.f32 0.0, %v941
      %v943 = vpop.f32.mrf.mxu0
      %v944 = vadd.f32 0.0, %v943
      %945 = vmatmul.bf16.gmra.mxu0 %v549
      %v946 = vpop.f32.mrf.mxu0
      %v947 = vadd.f32 0.0, %v946
      %v948 = vpop.f32.mrf.mxu0
      %v949 = vadd.f32 0.0, %v948
      %950 = vmatmul.bf16.gmra.mxu0 %v552
      %v951 = vpop.f32.mrf.mxu0
      %v952 = vadd.f32 0.0, %v951
      %v953 = vpop.f32.mrf.mxu0
      %v954 = vadd.f32 0.0, %v953
      %955 = vmatmul.bf16.gmra.mxu0 %v555
      %v956 = vpop.f32.mrf.mxu0
      %v957 = vadd.f32 0.0, %v956
      %v958 = vpop.f32.mrf.mxu0
      %v959 = vadd.f32 0.0, %v958
      %960 = vmatmul.bf16.gmra.mxu0 %v558
      %v961 = vpop.f32.mrf.mxu0
      %v962 = vadd.f32 0.0, %v961
      %v963 = vpop.f32.mrf.mxu0
      %v964 = vadd.f32 0.0, %v963
      %965 = vmatmul.bf16.gmra.mxu0 %v561
      %v966 = vpop.f32.mrf.mxu0
      %v967 = vadd.f32 0.0, %v966
      %v968 = vpop.f32.mrf.mxu0
      %v969 = vadd.f32 0.0, %v968
      %970 = vmatmul.bf16.gmra.mxu0 %v564
      %v971 = vpop.f32.mrf.mxu0
      %v972 = vadd.f32 0.0, %v971
      %v973 = vpop.f32.mrf.mxu0
      %v974 = vadd.f32 0.0, %v973
      %975 = vmatmul.bf16.gmra.mxu0 %v567
      %v976 = vpop.f32.mrf.mxu0
      %v977 = vadd.f32 0.0, %v976
      %v978 = vpop.f32.mrf.mxu0
      %v979 = vadd.f32 0.0, %v978
      %980 = vmatmul.bf16.gmra.mxu0 %v570
      %v981 = vpop.f32.mrf.mxu0
      %v982 = vadd.f32 0.0, %v981
      %v983 = vpop.f32.mrf.mxu0
      %v984 = vadd.f32 0.0, %v983
      %985 = vmatmul.bf16.gmra.mxu0 %v573
      %v986 = vpop.f32.mrf.mxu0
      %v987 = vadd.f32 0.0, %v986
      %v988 = vpop.f32.mrf.mxu0
      %v989 = vadd.f32 0.0, %v988
      %990 = vmatmul.bf16.gmra.mxu0 %v576
      %v991 = vpop.f32.mrf.mxu0
      %v992 = vadd.f32 0.0, %v991
      %v993 = vpop.f32.mrf.mxu0
      %v994 = vadd.f32 0.0, %v993
      %995 = vmatmul.bf16.gmra.mxu0 %v579
      %v996 = vpop.f32.mrf.mxu0
      %v997 = vadd.f32 0.0, %v996
      %v998 = vpop.f32.mrf.mxu0
      %v999 = vadd.f32 0.0, %v998
      %1000 = vmatmul.bf16.gmra.mxu0 %v582
      %v1001 = vpop.f32.mrf.mxu0
      %v1002 = vadd.f32 0.0, %v1001
      %v1003 = vpop.f32.mrf.mxu0
      %v1004 = vadd.f32 0.0, %v1003
      %1005 = vmatmul.bf16.gmra.mxu0 %v585
      %v1006 = vpop.f32.mrf.mxu0
      %v1007 = vadd.f32 0.0, %v1006
      %v1008 = vpop.f32.mrf.mxu0
      %v1009 = vadd.f32 0.0, %v1008
      %1010 = vmatmul.bf16.gmra.mxu0 %v588
      %v1011 = vpop.f32.mrf.mxu0
      %v1012 = vadd.f32 0.0, %v1011
      %v1013 = vpop.f32.mrf.mxu0
      %v1014 = vadd.f32 0.0, %v1013
      %1015 = vmatmul.bf16.gmra.mxu0 %v591
      %v1016 = vpop.f32.mrf.mxu0
      %v1017 = vadd.f32 0.0, %v1016
      %v1018 = vpop.f32.mrf.mxu0
      %v1019 = vadd.f32 0.0, %v1018
      %1020 = vdwg.mxu0
      %v1021 = vpack.c.bf16 %v942, %v942
      %v1022 = vpack.c.bf16 %v944, %v944
      %v1023 = vpack.c.bf16 %v947, %v947
      %v1024 = vpack.c.bf16 %v949, %v949
      %v1025 = vpack.c.bf16 %v952, %v952
      %v1026 = vpack.c.bf16 %v954, %v954
      %v1027 = vpack.c.bf16 %v957, %v957
      %v1028 = vpack.c.bf16 %v959, %v959
      %v1029 = vpack.c.bf16 %v962, %v962
      %v1030 = vpack.c.bf16 %v964, %v964
      %v1031 = vpack.c.bf16 %v967, %v967
      %v1032 = vpack.c.bf16 %v969, %v969
      %v1033 = vpack.c.bf16 %v972, %v972
      %v1034 = vpack.c.bf16 %v974, %v974
      %v1035 = vpack.c.bf16 %v977, %v977
      %v1036 = vpack.c.bf16 %v979, %v979
      %v1037 = vpack.c.bf16 %v982, %v982
      %v1038 = vpack.c.bf16 %v984, %v984
      %v1039 = vpack.c.bf16 %v987, %v987
      %v1040 = vpack.c.bf16 %v989, %v989
      %v1041 = vpack.c.bf16 %v992, %v992
      %v1042 = vpack.c.bf16 %v994, %v994
      %v1043 = vpack.c.bf16 %v997, %v997
      %v1044 = vpack.c.bf16 %v999, %v999
      %v1045 = vpack.c.bf16 %v1002, %v1002
      %v1046 = vpack.c.bf16 %v1004, %v1004
      %v1047 = vpack.c.bf16 %v1007, %v1007
      %v1048 = vpack.c.bf16 %v1009, %v1009
      %v1049 = vpack.c.bf16 %v1012, %v1012
      %v1050 = vpack.c.bf16 %v1014, %v1014
      %v1051 = vpack.c.bf16 %v1017, %v1017
      %v1052 = vpack.c.bf16 %v1019, %v1019
      %1053 = vst.msk [vmem:[%s403] sm:$0xf] %vm714, %v1021
      %1054 = vst.msk [vmem:[%s403 + $0x4] sm:$0xf] %vm714, %v1022
      %1055 = vst.msk [vmem:[%s403 + $0x8] sm:$0xf] %vm714, %v1023
      %1056 = vst.msk [vmem:[%s403 + $0xc] sm:$0xf] %vm714, %v1024
      %1057 = vst.msk [vmem:[%s403 + $0x10] sm:$0xf] %vm714, %v1025
      %1058 = vst.msk [vmem:[%s403 + $0x14] sm:$0xf] %vm714, %v1026
      %1059 = vst.msk [vmem:[%s403 + $0x18] sm:$0xf] %vm714, %v1027
      %1060 = vst.msk [vmem:[%s403 + $0x1c] sm:$0xf] %vm714, %v1028
      %1061 = vst.msk [vmem:[%s403 + $0x20] sm:$0xf] %vm714, %v1029
      %1062 = vst.msk [vmem:[%s403 + $0x24] sm:$0xf] %vm714, %v1030
      %1063 = vst.msk [vmem:[%s403 + $0x28] sm:$0xf] %vm714, %v1031
      %1064 = vst.msk [vmem:[%s403 + $0x2c] sm:$0xf] %vm714, %v1032
      %1065 = vst.msk [vmem:[%s403 + $0x30] sm:$0xf] %vm714, %v1033
      %1066 = vst.msk [vmem:[%s403 + $0x34] sm:$0xf] %vm714, %v1034
      %1067 = vst.msk [vmem:[%s403 + $0x38] sm:$0xf] %vm714, %v1035
      %1068 = vst.msk [vmem:[%s403 + $0x3c] sm:$0xf] %vm714, %v1036
      %1069 = vst.msk [vmem:[%s403 + $0x40] sm:$0xf] %vm714, %v1037
      %1070 = vst.msk [vmem:[%s403 + $0x44] sm:$0xf] %vm714, %v1038
      %1071 = vst.msk [vmem:[%s403 + $0x48] sm:$0xf] %vm714, %v1039
      %1072 = vst.msk [vmem:[%s403 + $0x4c] sm:$0xf] %vm714, %v1040
      %1073 = vst.msk [vmem:[%s403 + $0x50] sm:$0xf] %vm714, %v1041
      %1074 = vst.msk [vmem:[%s403 + $0x54] sm:$0xf] %vm714, %v1042
      %1075 = vst.msk [vmem:[%s403 + $0x58] sm:$0xf] %vm714, %v1043
      %1076 = vst.msk [vmem:[%s403 + $0x5c] sm:$0xf] %vm714, %v1044
      %1077 = vst.msk [vmem:[%s403 + $0x60] sm:$0xf] %vm714, %v1045
      %1078 = vst.msk [vmem:[%s403 + $0x64] sm:$0xf] %vm714, %v1046
      %1079 = vst.msk [vmem:[%s403 + $0x68] sm:$0xf] %vm714, %v1047
      %1080 = vst.msk [vmem:[%s403 + $0x6c] sm:$0xf] %vm714, %v1048
      %1081 = vst.msk [vmem:[%s403 + $0x70] sm:$0xf] %vm714, %v1049
      %1082 = vst.msk [vmem:[%s403 + $0x74] sm:$0xf] %vm714, %v1050
      %1083 = vst.msk [vmem:[%s403 + $0x78] sm:$0xf] %vm714, %v1051
      %1084 = vst.msk [vmem:[%s403 + $0x7c] sm:$0xf] %vm714, %v1052
      %v1085 = vld [vmem:[%s4] sm:$0xf]
      %v1086 = vld [vmem:[%s4 + $0x4] sm:$0xf]
      %v1087 = vld [vmem:[%s4 + $0x8] sm:$0xf]
      %v1088 = vld [vmem:[%s4 + $0xc] sm:$0xf]
      %v1093 = vunpack.c.l.b16 %v1085
      %v1094 = vunpack.c.l.b16 %v1086
      %v1095 = vunpack.c.l.b16 %v1087
      %v1096 = vunpack.c.l.b16 %v1088
      %v1097 = vpack.c.b16 %v1094, %v1093
      %v1098 = vpack.c.b16 %v1096, %v1095
      %1101 = vmatpush.bf16.msra.mxu0 0
      %1102 = vmatpush.bf16.msra.mxu0 0
      %1103 = vmatpush.bf16.msra.mxu0 0
      %1104 = vmatpush.bf16.msra.mxu0 0
      %1105 = vmatpush.bf16.msra.mxu0 0
      %1106 = vmatpush.bf16.msra.mxu0 0
      %1107 = vmatpush.bf16.msra.mxu0 %v1098
      %1108 = vmatpush.bf16.msra.mxu0 %v1097
      %1109 = vmatmul.bf16.gmra.mxu0 %v546
      %v1110 = vpop.f32.mrf.mxu0
      %v1111 = vadd.f32 0.0, %v1110
      %v1112 = vpop.f32.mrf.mxu0
      %v1113 = vadd.f32 0.0, %v1112
      %1114 = vmatmul.bf16.gmra.mxu0 %v549
      %v1115 = vpop.f32.mrf.mxu0
      %v1116 = vadd.f32 0.0, %v1115
      %v1117 = vpop.f32.mrf.mxu0
      %v1118 = vadd.f32 0.0, %v1117
      %1119 = vmatmul.bf16.gmra.mxu0 %v552
      %v1120 = vpop.f32.mrf.mxu0
      %v1121 = vadd.f32 0.0, %v1120
      %v1122 = vpop.f32.mrf.mxu0
      %v1123 = vadd.f32 0.0, %v1122
      %1124 = vmatmul.bf16.gmra.mxu0 %v555
      %v1125 = vpop.f32.mrf.mxu0
      %v1126 = vadd.f32 0.0, %v1125
      %v1127 = vpop.f32.mrf.mxu0
      %v1128 = vadd.f32 0.0, %v1127
      %1129 = vmatmul.bf16.gmra.mxu0 %v558
      %v1130 = vpop.f32.mrf.mxu0
      %v1131 = vadd.f32 0.0, %v1130
      %v1132 = vpop.f32.mrf.mxu0
      %v1133 = vadd.f32 0.0, %v1132
      %1134 = vmatmul.bf16.gmra.mxu0 %v561
      %v1135 = vpop.f32.mrf.mxu0
      %v1136 = vadd.f32 0.0, %v1135
      %v1137 = vpop.f32.mrf.mxu0
      %v1138 = vadd.f32 0.0, %v1137
      %1139 = vmatmul.bf16.gmra.mxu0 %v564
      %v1140 = vpop.f32.mrf.mxu0
      %v1141 = vadd.f32 0.0, %v1140
      %v1142 = vpop.f32.mrf.mxu0
      %v1143 = vadd.f32 0.0, %v1142
      %1144 = vmatmul.bf16.gmra.mxu0 %v567
      %v1145 = vpop.f32.mrf.mxu0
      %v1146 = vadd.f32 0.0, %v1145
      %v1147 = vpop.f32.mrf.mxu0
      %v1148 = vadd.f32 0.0, %v1147
      %1149 = vmatmul.bf16.gmra.mxu0 %v570
      %v1150 = vpop.f32.mrf.mxu0
      %v1151 = vadd.f32 0.0, %v1150
      %v1152 = vpop.f32.mrf.mxu0
      %v1153 = vadd.f32 0.0, %v1152
      %1154 = vmatmul.bf16.gmra.mxu0 %v573
      %v1155 = vpop.f32.mrf.mxu0
      %v1156 = vadd.f32 0.0, %v1155
      %v1157 = vpop.f32.mrf.mxu0
      %v1158 = vadd.f32 0.0, %v1157
      %1159 = vmatmul.bf16.gmra.mxu0 %v576
      %v1160 = vpop.f32.mrf.mxu0
      %v1161 = vadd.f32 0.0, %v1160
      %v1162 = vpop.f32.mrf.mxu0
      %v1163 = vadd.f32 0.0, %v1162
      %1164 = vmatmul.bf16.gmra.mxu0 %v579
      %v1165 = vpop.f32.mrf.mxu0
      %v1166 = vadd.f32 0.0, %v1165
      %v1167 = vpop.f32.mrf.mxu0
      %v1168 = vadd.f32 0.0, %v1167
      %1169 = vmatmul.bf16.gmra.mxu0 %v582
      %v1170 = vpop.f32.mrf.mxu0
      %v1171 = vadd.f32 0.0, %v1170
      %v1172 = vpop.f32.mrf.mxu0
      %v1173 = vadd.f32 0.0, %v1172
      %1174 = vmatmul.bf16.gmra.mxu0 %v585
      %v1175 = vpop.f32.mrf.mxu0
      %v1176 = vadd.f32 0.0, %v1175
      %v1177 = vpop.f32.mrf.mxu0
      %v1178 = vadd.f32 0.0, %v1177
      %1179 = vmatmul.bf16.gmra.mxu0 %v588
      %v1180 = vpop.f32.mrf.mxu0
      %v1181 = vadd.f32 0.0, %v1180
      %v1182 = vpop.f32.mrf.mxu0
      %v1183 = vadd.f32 0.0, %v1182
      %1184 = vmatmul.bf16.gmra.mxu0 %v591
      %v1185 = vpop.f32.mrf.mxu0
      %v1186 = vadd.f32 0.0, %v1185
      %v1187 = vpop.f32.mrf.mxu0
      %v1188 = vadd.f32 0.0, %v1187
      %1189 = vdwg.mxu0
      %vm1190 = vcmask 7168
      %1191 = vst.msk [vmem:[%s413] sm:$0xff] %vm1190, %v1111
      %1192 = vst.msk [vmem:[%s413 + $0x8] sm:$0xff] %vm1190, %v1113
      %1193 = vst.msk [vmem:[%s413 + $0x10] sm:$0xff] %vm1190, %v1116
      %1194 = vst.msk [vmem:[%s413 + $0x18] sm:$0xff] %vm1190, %v1118
      %1195 = vst.msk [vmem:[%s413 + $0x20] sm:$0xff] %vm1190, %v1121
      %1196 = vst.msk [vmem:[%s413 + $0x28] sm:$0xff] %vm1190, %v1123
      %1197 = vst.msk [vmem:[%s413 + $0x30] sm:$0xff] %vm1190, %v1126
      %1198 = vst.msk [vmem:[%s413 + $0x38] sm:$0xff] %vm1190, %v1128
      %1199 = vst.msk [vmem:[%s413 + $0x40] sm:$0xff] %vm1190, %v1131
      %1200 = vst.msk [vmem:[%s413 + $0x48] sm:$0xff] %vm1190, %v1133
      %1201 = vst.msk [vmem:[%s413 + $0x50] sm:$0xff] %vm1190, %v1136
      %1202 = vst.msk [vmem:[%s413 + $0x58] sm:$0xff] %vm1190, %v1138
      %1203 = vst.msk [vmem:[%s413 + $0x60] sm:$0xff] %vm1190, %v1141
      %1204 = vst.msk [vmem:[%s413 + $0x68] sm:$0xff] %vm1190, %v1143
      %1205 = vst.msk [vmem:[%s413 + $0x70] sm:$0xff] %vm1190, %v1146
      %1206 = vst.msk [vmem:[%s413 + $0x78] sm:$0xff] %vm1190, %v1148
      %1207 = vst.msk [vmem:[%s413 + $0x80] sm:$0xff] %vm1190, %v1151
      %1208 = vst.msk [vmem:[%s413 + $0x88] sm:$0xff] %vm1190, %v1153
      %1209 = vst.msk [vmem:[%s413 + $0x90] sm:$0xff] %vm1190, %v1156
      %1210 = vst.msk [vmem:[%s413 + $0x98] sm:$0xff] %vm1190, %v1158
      %1211 = vst.msk [vmem:[%s413 + $0xa0] sm:$0xff] %vm1190, %v1161
      %1212 = vst.msk [vmem:[%s413 + $0xa8] sm:$0xff] %vm1190, %v1163
      %1213 = vst.msk [vmem:[%s413 + $0xb0] sm:$0xff] %vm1190, %v1166
      %1214 = vst.msk [vmem:[%s413 + $0xb8] sm:$0xff] %vm1190, %v1168
      %1215 = vst.msk [vmem:[%s413 + $0xc0] sm:$0xff] %vm1190, %v1171
      %1216 = vst.msk [vmem:[%s413 + $0xc8] sm:$0xff] %vm1190, %v1173
      %1217 = vst.msk [vmem:[%s413 + $0xd0] sm:$0xff] %vm1190, %v1176
      %1218 = vst.msk [vmem:[%s413 + $0xd8] sm:$0xff] %vm1190, %v1178
      %1219 = vst.msk [vmem:[%s413 + $0xe0] sm:$0xff] %vm1190, %v1181
      %1220 = vst.msk [vmem:[%s413 + $0xe8] sm:$0xff] %vm1190, %v1183
      %1221 = vst.msk [vmem:[%s413 + $0xf0] sm:$0xff] %vm1190, %v1186
      %1222 = vst.msk [vmem:[%s413 + $0xf8] sm:$0xff] %vm1190, %v1188
      %s1223 = smul.u32 32, %s25
      %p1224 = scmp.lt.s32.totalorder %s24, 1
      %s1225 = scalar_select %p1224, %s24, 1
      %p1226 = scmp.lt.s32.totalorder %s1223, 31
      %s1227 = scalar_select %p1226, %s1223, 31
      %s1228 = smul.addr %s1225, 32
      %s1229 = sadd.s32 %s1227, %s1228
      %s1230 = smul.addr %s1229, 4
      %s1231 = scalar_lea.vmem %s5, %s1230
      %s1232 = smul.u32 32, %s25
      %p1233 = scmp.lt.s32.totalorder %s24, 1
      %s1234 = scalar_select %p1233, %s24, 1
      %p1235 = scmp.lt.s32.totalorder %s1232, 31
      %s1236 = scalar_select %p1235, %s1232, 31
      %s1237 = smul.addr %s1234, 32
      %s1238 = sadd.s32 %s1236, %s1237
      %s1239 = smul.addr %s1238, 4
      %s1240 = scalar_lea.vmem %s6, %s1239
      %s1241 = smul.u32 32, %s25
      %p1242 = scmp.lt.s32.totalorder %s24, 1
      %s1243 = scalar_select %p1242, %s24, 1
      %p1244 = scmp.lt.s32.totalorder %s1241, 31
      %s1245 = scalar_select %p1244, %s1241, 31
      %s1246 = smul.addr %s1243, 32
      %s1247 = sadd.s32 %s1245, %s1246
      %s1248 = smul.addr %s1247, 4
      %s1249 = scalar_lea.vmem %s7, %s1248
      %s1250 = smul.u32 32, %s25
      %p1251 = scmp.lt.s32.totalorder %s24, 1
      %s1252 = scalar_select %p1251, %s24, 1
      %p1253 = scmp.lt.s32.totalorder %s1250, 31
      %s1254 = scalar_select %p1253, %s1250, 31
      %s1255 = smul.addr %s1252, 32
      %s1256 = sadd.s32 %s1254, %s1255
      %s1257 = smul.addr %s1256, 8
      %s1258 = scalar_lea.vmem %s8, %s1257
      // Predicated region
      $region41: #{tpu_custom_call.1} parent=39 // pred_check
        %p1259 = pneg %p164
      $region42: #{tpu_custom_call.1} parent=39 // pred_check_branch
        %1261 = sbr.rel (%p1259) target = $region44
      $region43: #{tpu_custom_call.1} parent=39 // pred_region
        %s1262 = smul.u32 32, %s25
      $region44: #{tpu_custom_call.1} parent=39 // pred_fallthru
        _
      // Predicated region
      $region45: #{tpu_custom_call.1} parent=39 // pred_check
        %p1263 = pneg %p192
      $region46: #{tpu_custom_call.1} parent=39 // pred_check_branch
        %1265 = sbr.rel (%p1263) target = $region48
      $region47: #{tpu_custom_call.1} parent=39 // pred_region
        %s1266 = smul.u32 32, %s25
      $region48: #{tpu_custom_call.1} parent=39 // pred_fallthru
        _
      // Predicated region
      $region49: #{tpu_custom_call.1} parent=39 // pred_check
        %p1267 = pneg %p220
      $region50: #{tpu_custom_call.1} parent=39 // pred_check_branch
        %1269 = sbr.rel (%p1267) target = $region52
      $region51: #{tpu_custom_call.1} parent=39 // pred_region
        %s1270 = smul.u32 32, %s25
      $region52: #{tpu_custom_call.1} parent=39 // pred_fallthru
        _
      // Predicated region
      $region53: #{tpu_custom_call.1} parent=39 // pred_check
        %p1271 = pneg %p248
      $region54: #{tpu_custom_call.1} parent=39 // pred_check_branch
        %1273 = sbr.rel (%p1271) target = $region56
      $region55: #{tpu_custom_call.1} parent=39 // pred_region
        %s1274 = smul.u32 32, %s25
      $region56: #{tpu_custom_call.1} parent=39 // pred_fallthru
        _
    $region40: #{tpu_custom_call.1} parent=5 // pred_fallthru
      _
    %p1275 = scmp.le.s32.totalorder 2, %s15
    // Predicated region
    $region57: #{tpu_custom_call.1} parent=5 // pred_check
      %p1276 = pneg %p1275
    $region58: #{tpu_custom_call.1} parent=5 // pred_check_branch
      %1278 = sbr.rel (%p1276) target = $region60
    $region59: #{tpu_custom_call.1} parent=5 // pred_region
      %s1279 = ssub.s32 %s15, 2
      // Predicated region
      $region61: #{tpu_custom_call.1} parent=59 // pred_check
        %p1280 = pneg %p170
      $region62: #{tpu_custom_call.1} parent=59 // pred_check_branch
        %1282 = sbr.rel (%p1280) target = $region64
      $region63: #{tpu_custom_call.1} parent=59 // pred_region
        %s1283 = smul.u32 32, %s27
        %p1284 = scmp.lt.s32.totalorder %s26, 1
        %s1285 = scalar_select %p1284, %s26, 1
        %p1286 = scmp.lt.s32.totalorder %s1283, 31
        %s1287 = scalar_select %p1286, %s1283, 31
        %s1288 = smul.addr %s1285, 32
        %s1289 = sadd.s32 %s1287, %s1288
        %s1290 = smul.addr %s1289, 4
        %s1291 = scalar_lea.vmem %s5, %s1290
      $region64: #{tpu_custom_call.1} parent=59 // pred_fallthru
        _
      // Predicated region
      $region65: #{tpu_custom_call.1} parent=59 // pred_check
        %p1292 = pneg %p198
      $region66: #{tpu_custom_call.1} parent=59 // pred_check_branch
        %1294 = sbr.rel (%p1292) target = $region68
      $region67: #{tpu_custom_call.1} parent=59 // pred_region
        %s1295 = smul.u32 32, %s27
        %p1296 = scmp.lt.s32.totalorder %s26, 1
        %s1297 = scalar_select %p1296, %s26, 1
        %p1298 = scmp.lt.s32.totalorder %s1295, 31
        %s1299 = scalar_select %p1298, %s1295, 31
        %s1300 = smul.addr %s1297, 32
        %s1301 = sadd.s32 %s1299, %s1300
        %s1302 = smul.addr %s1301, 4
        %s1303 = scalar_lea.vmem %s6, %s1302
      $region68: #{tpu_custom_call.1} parent=59 // pred_fallthru
        _
      // Predicated region
      $region69: #{tpu_custom_call.1} parent=59 // pred_check
        %p1304 = pneg %p226
      $region70: #{tpu_custom_call.1} parent=59 // pred_check_branch
        %1306 = sbr.rel (%p1304) target = $region72
      $region71: #{tpu_custom_call.1} parent=59 // pred_region
        %s1307 = smul.u32 32, %s27
        %p1308 = scmp.lt.s32.totalorder %s26, 1
        %s1309 = scalar_select %p1308, %s26, 1
        %p1310 = scmp.lt.s32.totalorder %s1307, 31
        %s1311 = scalar_select %p1310, %s1307, 31
        %s1312 = smul.addr %s1309, 32
        %s1313 = sadd.s32 %s1311, %s1312
        %s1314 = smul.addr %s1313, 4
        %s1315 = scalar_lea.vmem %s7, %s1314
      $region72: #{tpu_custom_call.1} parent=59 // pred_fallthru
        _
      // Predicated region
      $region73: #{tpu_custom_call.1} parent=59 // pred_check
        %p1316 = pneg %p254
      $region74: #{tpu_custom_call.1} parent=59 // pred_check_branch
        %1318 = sbr.rel (%p1316) target = $region76
      $region75: #{tpu_custom_call.1} parent=59 // pred_region
        %s1319 = smul.u32 32, %s27
        %p1320 = scmp.lt.s32.totalorder %s26, 1
        %s1321 = scalar_select %p1320, %s26, 1
        %p1322 = scmp.lt.s32.totalorder %s1319, 31
        %s1323 = scalar_select %p1322, %s1319, 31
        %s1324 = smul.addr %s1321, 32
        %s1325 = sadd.s32 %s1323, %s1324
        %s1326 = smul.addr %s1325, 8
        %s1327 = scalar_lea.vmem %s8, %s1326
      $region76: #{tpu_custom_call.1} parent=59 // pred_fallthru
        _
    $region60: #{tpu_custom_call.1} parent=5 // pred_fallthru
      _
  $region6: #{tpu_custom_call.1} parent=0 // loop_footer
    %s19 = sadd.s32 1, %s15
  $region7: #{tpu_custom_call.1} parent=0 // loop_footer_branch
    %14 = sbr.rel target = $region3
  $region8: #{tpu_custom_call.1} parent=0 // loop_exit
    _

</llo_original>
